<compile_context>
chip_gen: v7x
topology: tpu7x:2x2x1
jax: 0.10.0
libtpu: 0.0.40
codegen_flags: <defaults>
</compile_context>

<pallas_src>
import jax
import jax.numpy as jnp
import numpy as np
from jax import lax
from jax.experimental import pallas as pl
from jax.experimental.pallas import tpu as pltpu


def _make_kernel(C, H, W, R, K, HWp):
    pad = K // 2
    HW = H * W
    KK = K * K
    inv_hw = 1.0 / float(HW)      # true divisor; zero-padded lanes contribute 0 to the sum
    inv_c = 1.0 / float(C)
    w_pow2 = (W & (W - 1)) == 0
    w_shift = W.bit_length() - 1

    def kernel(x_ref, w1t_ref, b1_ref, w2_ref, b2_ref, ws_ref, bs_ref, o_ref):
        # x_ref: (1, C, HWp) lane-dense block in VMEM.
        x = x_ref[0]                                            # (C, HWp)

        # ---- channel attention: GAP -> 1x1 conv -> ReLU -> 1x1 conv -> sigmoid
        gap = jnp.sum(x, axis=-1, keepdims=True) * inv_hw       # (C, 1)   lane reduce
        h = jnp.maximum(
            jnp.sum(w1t_ref[...] * gap, axis=0, keepdims=True) + b1_ref[...],
            0.0)                                                # (1, R)   sublane reduce
        ca = jax.nn.sigmoid(
            jnp.sum(w2_ref[...] * h, axis=1, keepdims=True) + b2_ref[...])  # (C, 1)

        # att stays live in vregs (C*HWp is tiny here).  For very large C this
        # pass (and the final modulation) would be chunked over sublane tiles
        # of x_ref with running max/sum accumulators to bound vreg pressure.
        att = x * ca                                            # (C, HWp)

        # ---- channel-wise max / mean pooling (sublane reductions over C) ----
        mx = jnp.max(att, axis=0, keepdims=True)                # (1, HWp)
        av = jnp.sum(att, axis=0, keepdims=True) * inv_c        # (1, HWp)

        # ---- 7x7 spatial conv (2 -> 1 ch, zero padding) -- separable rolls --
        idx = lax.broadcasted_iota(jnp.int32, (1, HWp), 1)
        if w_pow2:
            row = idx >> w_shift
            col = idx & (W - 1)
        else:
            row = idx // W
            col = idx % W

        # Horizontal pass: the 7 dx-shifted, column-masked copies of each
        # pooled map, built once (12 rolls + 12 masks, not 98 / ~90).
        mx_dx = []
        av_dx = []
        for kx in range(K):
            dx = kx - pad
            if dx == 0:
                mx_dx.append(mx)
                av_dx.append(av)
                continue
            shift = (-dx) % HWp
            smx = pltpu.roll(mx, shift, axis=1)                 # XLU, overlaps VPU MACs
            sav = pltpu.roll(av, shift, axis=1)
            cmask = (col < (W - dx)) if dx > 0 else (col >= -dx)
            mx_dx.append(jnp.where(cmask, smx, 0.0))
            av_dx.append(jnp.where(cmask, sav, 0.0))

        # Vertical pass: per-ky horizontal weighted sum (scalar SMEM weights,
        # pure VPU MACs), then a single dy roll + row mask per ky.
        acc = jnp.full((1, HWp), bs_ref[0], jnp.float32)
        for ky in range(K):
            dy = ky - pad
            hrow = None
            for kx in range(K):
                j = ky * K + kx
                t = mx_dx[kx] * ws_ref[j] + av_dx[kx] * ws_ref[KK + j]
                hrow = t if hrow is None else hrow + t
            if dy != 0:
                hrow = pltpu.roll(hrow, (-(dy * W)) % HWp, axis=1)
                rmask = (row < (H - dy)) if dy > 0 else (row >= -dy)
                hrow = jnp.where(rmask, hrow, 0.0)
            acc = acc + hrow
        sp = jax.nn.sigmoid(acc)                                # (1, HWp)

        # ---- final modulation: a single vector-store pass (no stash/reload) --
        o_ref[0] = att * sp

    return kernel


def _vmem_limit_bytes(block_bytes, weight_bytes):
    # Double-buffered input + output block, plus resident weights and slack.
    need = 4 * block_bytes + 2 * weight_bytes + (2 << 20)
    cap = 48 << 20                       # safe on every generation (v7x: 64 MiB/TC)
    try:
        info = pltpu.get_tpu_info()
        cap = int(getattr(info, "vmem_capacity_bytes", 64 << 20)) * 3 // 4
    except Exception:
        pass
    return int(min(max(need, 32 << 20), max(cap, 32 << 20)))


def channel_spatial_attention(x, w1, b1, w2, b2, ws, bs):
    """x: (B, C, H, W) f32.  Returns (B, C, H, W) f32."""
    B, C, H, W = x.shape
    R = w1.shape[0]
    K = ws.shape[-1]
    HW = H * W
    HWp = ((HW + 127) // 128) * 128                             # lane-dense last dim
    kernel = _make_kernel(C, H, W, R, K, HWp)

    # Lane-dense layout at the pallas_call boundary (free reshapes; zero-pad
    # the flattened spatial dim up to a multiple of 128 when needed).
    x2 = x.reshape(B, C, HW).astype(jnp.float32)
    if HWp != HW:
        x2 = jnp.pad(x2, ((0, 0), (0, 0), (0, HWp - HW)))
    w1t = jnp.asarray(w1, jnp.float32).T                        # (C, R)
    b1r = jnp.asarray(b1, jnp.float32).reshape(1, R)
    w2m = jnp.asarray(w2, jnp.float32).reshape(C, R)
    b2c = jnp.asarray(b2, jnp.float32).reshape(C, 1)
    wsf = jnp.asarray(ws, jnp.float32).reshape(-1)              # (2*K*K,) max taps then avg taps
    bsf = jnp.asarray(bs, jnp.float32).reshape(-1)              # (1,)

    def full_vmem(shape):
        return pl.BlockSpec(shape, lambda b: tuple(0 for _ in shape))

    smem_spec = pl.BlockSpec(memory_space=pltpu.MemorySpace.SMEM)

    block_bytes = C * HWp * 4
    weight_bytes = (2 * C * R + R + C + 2 * K * K + 1) * 4

    out2 = pl.pallas_call(
        kernel,
        out_shape=jax.ShapeDtypeStruct((B, C, HWp), jnp.float32),
        grid_spec=pltpu.PrefetchScalarGridSpec(
            num_scalar_prefetch=0,
            grid=(B,),
            in_specs=[
                pl.BlockSpec((1, C, HWp), lambda b: (b, 0, 0)),  # x
                full_vmem((C, R)),                               # w1^T
                full_vmem((1, R)),                               # b1
                full_vmem((C, R)),                               # w2
                full_vmem((C, 1)),                               # b2
                smem_spec,                                       # ws (2*K*K,)
                smem_spec,                                       # bs (1,)
            ],
            out_specs=pl.BlockSpec((1, C, HWp), lambda b: (b, 0, 0)),
        ),
        compiler_params=pltpu.CompilerParams(
            dimension_semantics=("parallel",),
            vmem_limit_bytes=_vmem_limit_bytes(block_bytes, weight_bytes),
        ),
    )(x2, w1t, b1r, w2m, b2c, wsf, bsf)

    if HWp != HW:
        out2 = out2[..., :HW]
    return out2.reshape(B, C, H, W)


def reference(x, w1, b1, w2, b2, ws, bs):
    """Pure-JAX reference mirroring the PyTorch forward."""
    gap = jnp.mean(x, axis=(2, 3))                              # (B, C)
    h = jax.nn.relu(gap @ w1.T + b1)                            # (B, R)
    ca = jax.nn.sigmoid(h @ w2.T + b2)                          # (B, C)
    att = x * ca[:, :, None, None]                              # (B, C, H, W)
    mx = jnp.max(att, axis=1, keepdims=True)
    av = jnp.mean(att, axis=1, keepdims=True)
    sp_in = jnp.concatenate([mx, av], axis=1)                   # (B, 2, H, W)
    conv = lax.conv_general_dilated(
        sp_in, ws, window_strides=(1, 1), padding=((3, 3), (3, 3)),
        dimension_numbers=("NCHW", "OIHW", "NCHW")) + bs[0]
    sp = jax.nn.sigmoid(conv)                                   # (B, 1, H, W)
    return att * sp


if __name__ == "__main__":
    key = jax.random.PRNGKey(0)
    B, C, H, W = 2, 4, 16, 16
    reduction_ratio = 16
    R = max(1, C // reduction_ratio)
    K = 7

    ks = jax.random.split(key, 7)
    x = jax.random.normal(ks[0], (B, C, H, W), jnp.float32)
    # channel_attention: Conv2d(C->R, 1x1), Conv2d(R->C, 1x1)
    w1 = jax.random.normal(ks[1], (R, C), jnp.float32) * 0.5
    b1 = jax.random.normal(ks[2], (R,), jnp.float32) * 0.1
    w2 = jax.random.normal(ks[3], (C, R), jnp.float32) * 0.5
    b2 = jax.random.normal(ks[4], (C,), jnp.float32) * 0.1
    # spatial_attention: Conv2d(2->1, 7x7, padding=3)
    ws = jax.random.normal(ks[5], (1, 2, K, K), jnp.float32) * 0.1
    bs = jax.random.normal(ks[6], (1,), jnp.float32) * 0.1

    out = channel_spatial_attention(x, w1, b1, w2, b2, ws, bs)
    out = jax.block_until_ready(out)

    ref = reference(x, w1, b1, w2, b2, ws, bs)
    np.testing.assert_allclose(np.asarray(out), np.asarray(ref), rtol=1e-4, atol=1e-4)
    print("KERNEL_OK")
</pallas_src>

<mosaic_0001>
module attributes {stable_mosaic.version = 11 : i64} {
  func.func @kernel(%arg0: i32, %arg1: memref<1x4x256xf32, #tpu.memory_space<vmem>>, %arg2: memref<4x1xf32, #tpu.memory_space<vmem>>, %arg3: memref<1x1xf32, #tpu.memory_space<vmem>>, %arg4: memref<4x1xf32, #tpu.memory_space<vmem>>, %arg5: memref<4x1xf32, #tpu.memory_space<vmem>>, %arg6: memref<98xf32, #tpu.memory_space<smem>>, %arg7: memref<1xf32, #tpu.memory_space<smem>>, %arg8: memref<1x4x256xf32, #tpu.memory_space<vmem>>) attributes {dimension_semantics = [#tpu.dimension_semantics<parallel>], iteration_bounds = array<i64: 2>, scalar_prefetch = 0 : i64, scratch_operands = 0 : i64, tpu.core_type = #tpu.core_type<tc>, window_params = [{transform_indices = @transform_0, window_bounds = array<i64: 1, 4, 256>}, {pipeline_mode = #tpu.pipeline_mode<synchronous>, transform_indices = @transform_1, window_bounds = array<i64: 4, 1>}, {pipeline_mode = #tpu.pipeline_mode<synchronous>, transform_indices = @transform_2, window_bounds = array<i64: 1, 1>}, {pipeline_mode = #tpu.pipeline_mode<synchronous>, transform_indices = @transform_3, window_bounds = array<i64: 4, 1>}, {pipeline_mode = #tpu.pipeline_mode<synchronous>, transform_indices = @transform_4, window_bounds = array<i64: 4, 1>}, {transform_indices = @transform_5, window_bounds = array<i64: 98>}, {transform_indices = @transform_6, window_bounds = array<i64: 1>}, {transform_indices = @transform_7, window_bounds = array<i64: 1, 4, 256>}]} {
    %c0 = arith.constant 0 : index
    %c0_0 = arith.constant 0 : index
    %c0_1 = arith.constant 0 : index
    %0 = vector.load %arg1[%c0, %c0_0, %c0_1] : memref<1x4x256xf32, #tpu.memory_space<vmem>>, vector<1x4x256xf32>
    %1 = vector.shape_cast %0 : vector<1x4x256xf32> to vector<4x256xf32>
    %cst = arith.constant dense<0.000000e+00> : vector<4xf32>
    %2 = vector.multi_reduction <add>, %1, %cst [1] : vector<4x256xf32> to vector<4xf32>
    %3 = vector.shape_cast %2 : vector<4xf32> to vector<4x1xf32>
    %cst_2 = arith.constant 3.906250e-03 : f32
    %4 = vector.broadcast %cst_2 : f32 to vector<4x1xf32>
    %5 = arith.mulf %3, %4 : vector<4x1xf32>
    %c0_3 = arith.constant 0 : index
    %c0_4 = arith.constant 0 : index
    %6 = vector.load %arg2[%c0_3, %c0_4] : memref<4x1xf32, #tpu.memory_space<vmem>>, vector<4x1xf32>
    %7 = arith.mulf %6, %5 : vector<4x1xf32>
    %cst_5 = arith.constant dense<0.000000e+00> : vector<1xf32>
    %8 = vector.multi_reduction <add>, %7, %cst_5 [0] : vector<4x1xf32> to vector<1xf32>
    %9 = vector.shape_cast %8 : vector<1xf32> to vector<1x1xf32>
    %c0_6 = arith.constant 0 : index
    %c0_7 = arith.constant 0 : index
    %10 = vector.load %arg3[%c0_6, %c0_7] : memref<1x1xf32, #tpu.memory_space<vmem>>, vector<1x1xf32>
    %11 = arith.addf %9, %10 : vector<1x1xf32>
    %cst_8 = arith.constant 0.000000e+00 : f32
    %12 = vector.broadcast %cst_8 : f32 to vector<1x1xf32>
    %13 = arith.maximumf %11, %12 : vector<1x1xf32>
    %c0_9 = arith.constant 0 : index
    %c0_10 = arith.constant 0 : index
    %14 = vector.load %arg4[%c0_9, %c0_10] : memref<4x1xf32, #tpu.memory_space<vmem>>, vector<4x1xf32>
    %15 = vector.broadcast %13 : vector<1x1xf32> to vector<4x1xf32>
    %16 = arith.mulf %14, %15 : vector<4x1xf32>
    %cst_11 = arith.constant dense<0.000000e+00> : vector<4xf32>
    %17 = vector.multi_reduction <add>, %16, %cst_11 [1] : vector<4x1xf32> to vector<4xf32>
    %18 = vector.shape_cast %17 : vector<4xf32> to vector<4x1xf32>
    %c0_12 = arith.constant 0 : index
    %c0_13 = arith.constant 0 : index
    %19 = vector.load %arg5[%c0_12, %c0_13] : memref<4x1xf32, #tpu.memory_space<vmem>>, vector<4x1xf32>
    %20 = arith.addf %18, %19 : vector<4x1xf32>
    %21 = arith.negf %20 : vector<4x1xf32>
    %22 = math.exp %21 : vector<4x1xf32>
    %cst_14 = arith.constant 1.000000e+00 : f32
    %23 = vector.broadcast %cst_14 : f32 to vector<4x1xf32>
    %24 = arith.addf %23, %22 : vector<4x1xf32>
    %25 = arith.divf %23, %24 : vector<4x1xf32>
    %26 = vector.broadcast %25 : vector<4x1xf32> to vector<4x256xf32>
    %27 = arith.mulf %1, %26 : vector<4x256xf32>
    %cst_15 = arith.constant dense<0xFF800000> : vector<256xf32>
    %28 = vector.multi_reduction <maximumf>, %27, %cst_15 [0] : vector<4x256xf32> to vector<256xf32>
    %29 = vector.shape_cast %28 : vector<256xf32> to vector<1x256xf32>
    %cst_16 = arith.constant dense<0.000000e+00> : vector<256xf32>
    %30 = vector.multi_reduction <add>, %27, %cst_16 [0] : vector<4x256xf32> to vector<256xf32>
    %31 = vector.shape_cast %30 : vector<256xf32> to vector<1x256xf32>
    %cst_17 = arith.constant 2.500000e-01 : f32
    %32 = vector.broadcast %cst_17 : f32 to vector<1x256xf32>
    %33 = arith.mulf %31, %32 : vector<1x256xf32>
    %34 = tpu.iota {dimensions = array<i32: 1>} : vector<1x256xi32>
    %c4_i32 = arith.constant 4 : i32
    %35 = vector.broadcast %c4_i32 : i32 to vector<1x256xi32>
    %36 = arith.shrsi %34, %35 : vector<1x256xi32>
    %c15_i32 = arith.constant 15 : i32
    %37 = vector.broadcast %c15_i32 : i32 to vector<1x256xi32>
    %38 = arith.andi %34, %37 : vector<1x256xi32>
    %c3_i32 = arith.constant 3 : i32
    %39 = tpu.dynamic_rotate %29 by %c3_i32 dim 1 : vector<1x256xf32>, i32 -> vector<1x256xf32>
    %c3_i32_18 = arith.constant 3 : i32
    %40 = tpu.dynamic_rotate %33 by %c3_i32_18 dim 1 : vector<1x256xf32>, i32 -> vector<1x256xf32>
    %c3_i32_19 = arith.constant 3 : i32
    %41 = vector.broadcast %c3_i32_19 : i32 to vector<1x256xi32>
    %42 = arith.cmpi sge, %38, %41 : vector<1x256xi32>
    %cst_20 = arith.constant 0.000000e+00 : f32
    %43 = vector.broadcast %cst_20 : f32 to vector<1x256xf32>
    %44 = arith.select %42, %39, %43 : vector<1x256xi1>, vector<1x256xf32>
    %cst_21 = arith.constant 0.000000e+00 : f32
    %45 = vector.broadcast %cst_21 : f32 to vector<1x256xf32>
    %46 = arith.select %42, %40, %45 : vector<1x256xi1>, vector<1x256xf32>
    %c2_i32 = arith.constant 2 : i32
    %47 = tpu.dynamic_rotate %29 by %c2_i32 dim 1 : vector<1x256xf32>, i32 -> vector<1x256xf32>
    %c2_i32_22 = arith.constant 2 : i32
    %48 = tpu.dynamic_rotate %33 by %c2_i32_22 dim 1 : vector<1x256xf32>, i32 -> vector<1x256xf32>
    %c2_i32_23 = arith.constant 2 : i32
    %49 = vector.broadcast %c2_i32_23 : i32 to vector<1x256xi32>
    %50 = arith.cmpi sge, %38, %49 : vector<1x256xi32>
    %cst_24 = arith.constant 0.000000e+00 : f32
    %51 = vector.broadcast %cst_24 : f32 to vector<1x256xf32>
    %52 = arith.select %50, %47, %51 : vector<1x256xi1>, vector<1x256xf32>
    %cst_25 = arith.constant 0.000000e+00 : f32
    %53 = vector.broadcast %cst_25 : f32 to vector<1x256xf32>
    %54 = arith.select %50, %48, %53 : vector<1x256xi1>, vector<1x256xf32>
    %c1_i32 = arith.constant 1 : i32
    %55 = tpu.dynamic_rotate %29 by %c1_i32 dim 1 : vector<1x256xf32>, i32 -> vector<1x256xf32>
    %c1_i32_26 = arith.constant 1 : i32
    %56 = tpu.dynamic_rotate %33 by %c1_i32_26 dim 1 : vector<1x256xf32>, i32 -> vector<1x256xf32>
    %c1_i32_27 = arith.constant 1 : i32
    %57 = vector.broadcast %c1_i32_27 : i32 to vector<1x256xi32>
    %58 = arith.cmpi sge, %38, %57 : vector<1x256xi32>
    %cst_28 = arith.constant 0.000000e+00 : f32
    %59 = vector.broadcast %cst_28 : f32 to vector<1x256xf32>
    %60 = arith.select %58, %55, %59 : vector<1x256xi1>, vector<1x256xf32>
    %cst_29 = arith.constant 0.000000e+00 : f32
    %61 = vector.broadcast %cst_29 : f32 to vector<1x256xf32>
    %62 = arith.select %58, %56, %61 : vector<1x256xi1>, vector<1x256xf32>
    %c255_i32 = arith.constant 255 : i32
    %63 = tpu.dynamic_rotate %29 by %c255_i32 dim 1 : vector<1x256xf32>, i32 -> vector<1x256xf32>
    %c255_i32_30 = arith.constant 255 : i32
    %64 = tpu.dynamic_rotate %33 by %c255_i32_30 dim 1 : vector<1x256xf32>, i32 -> vector<1x256xf32>
    %c15_i32_31 = arith.constant 15 : i32
    %65 = vector.broadcast %c15_i32_31 : i32 to vector<1x256xi32>
    %66 = arith.cmpi slt, %38, %65 : vector<1x256xi32>
    %cst_32 = arith.constant 0.000000e+00 : f32
    %67 = vector.broadcast %cst_32 : f32 to vector<1x256xf32>
    %68 = arith.select %66, %63, %67 : vector<1x256xi1>, vector<1x256xf32>
    %cst_33 = arith.constant 0.000000e+00 : f32
    %69 = vector.broadcast %cst_33 : f32 to vector<1x256xf32>
    %70 = arith.select %66, %64, %69 : vector<1x256xi1>, vector<1x256xf32>
    %c254_i32 = arith.constant 254 : i32
    %71 = tpu.dynamic_rotate %29 by %c254_i32 dim 1 : vector<1x256xf32>, i32 -> vector<1x256xf32>
    %c254_i32_34 = arith.constant 254 : i32
    %72 = tpu.dynamic_rotate %33 by %c254_i32_34 dim 1 : vector<1x256xf32>, i32 -> vector<1x256xf32>
    %c14_i32 = arith.constant 14 : i32
    %73 = vector.broadcast %c14_i32 : i32 to vector<1x256xi32>
    %74 = arith.cmpi slt, %38, %73 : vector<1x256xi32>
    %cst_35 = arith.constant 0.000000e+00 : f32
    %75 = vector.broadcast %cst_35 : f32 to vector<1x256xf32>
    %76 = arith.select %74, %71, %75 : vector<1x256xi1>, vector<1x256xf32>
    %cst_36 = arith.constant 0.000000e+00 : f32
    %77 = vector.broadcast %cst_36 : f32 to vector<1x256xf32>
    %78 = arith.select %74, %72, %77 : vector<1x256xi1>, vector<1x256xf32>
    %c253_i32 = arith.constant 253 : i32
    %79 = tpu.dynamic_rotate %29 by %c253_i32 dim 1 : vector<1x256xf32>, i32 -> vector<1x256xf32>
    %c253_i32_37 = arith.constant 253 : i32
    %80 = tpu.dynamic_rotate %33 by %c253_i32_37 dim 1 : vector<1x256xf32>, i32 -> vector<1x256xf32>
    %c13_i32 = arith.constant 13 : i32
    %81 = vector.broadcast %c13_i32 : i32 to vector<1x256xi32>
    %82 = arith.cmpi slt, %38, %81 : vector<1x256xi32>
    %cst_38 = arith.constant 0.000000e+00 : f32
    %83 = vector.broadcast %cst_38 : f32 to vector<1x256xf32>
    %84 = arith.select %82, %79, %83 : vector<1x256xi1>, vector<1x256xf32>
    %cst_39 = arith.constant 0.000000e+00 : f32
    %85 = vector.broadcast %cst_39 : f32 to vector<1x256xf32>
    %86 = arith.select %82, %80, %85 : vector<1x256xi1>, vector<1x256xf32>
    %c0_40 = arith.constant 0 : index
    %87 = memref.load %arg7[%c0_40] : memref<1xf32, #tpu.memory_space<smem>>
    %88 = vector.broadcast %87 : f32 to vector<1x256xf32>
    %c0_41 = arith.constant 0 : index
    %89 = memref.load %arg6[%c0_41] : memref<98xf32, #tpu.memory_space<smem>>
    %90 = vector.broadcast %89 : f32 to vector<1x256xf32>
    %91 = arith.mulf %44, %90 : vector<1x256xf32>
    %c49 = arith.constant 49 : index
    %92 = memref.load %arg6[%c49] : memref<98xf32, #tpu.memory_space<smem>>
    %93 = vector.broadcast %92 : f32 to vector<1x256xf32>
    %94 = arith.mulf %46, %93 : vector<1x256xf32>
    %95 = arith.addf %91, %94 : vector<1x256xf32>
    %c1 = arith.constant 1 : index
    %96 = memref.load %arg6[%c1] : memref<98xf32, #tpu.memory_space<smem>>
    %97 = vector.broadcast %96 : f32 to vector<1x256xf32>
    %98 = arith.mulf %52, %97 : vector<1x256xf32>
    %c50 = arith.constant 50 : index
    %99 = memref.load %arg6[%c50] : memref<98xf32, #tpu.memory_space<smem>>
    %100 = vector.broadcast %99 : f32 to vector<1x256xf32>
    %101 = arith.mulf %54, %100 : vector<1x256xf32>
    %102 = arith.addf %98, %101 : vector<1x256xf32>
    %103 = arith.addf %95, %102 : vector<1x256xf32>
    %c2 = arith.constant 2 : index
    %104 = memref.load %arg6[%c2] : memref<98xf32, #tpu.memory_space<smem>>
    %105 = vector.broadcast %104 : f32 to vector<1x256xf32>
    %106 = arith.mulf %60, %105 : vector<1x256xf32>
    %c51 = arith.constant 51 : index
    %107 = memref.load %arg6[%c51] : memref<98xf32, #tpu.memory_space<smem>>
    %108 = vector.broadcast %107 : f32 to vector<1x256xf32>
    %109 = arith.mulf %62, %108 : vector<1x256xf32>
    %110 = arith.addf %106, %109 : vector<1x256xf32>
    %111 = arith.addf %103, %110 : vector<1x256xf32>
    %c3 = arith.constant 3 : index
    %112 = memref.load %arg6[%c3] : memref<98xf32, #tpu.memory_space<smem>>
    %113 = vector.broadcast %112 : f32 to vector<1x256xf32>
    %114 = arith.mulf %29, %113 : vector<1x256xf32>
    %c52 = arith.constant 52 : index
    %115 = memref.load %arg6[%c52] : memref<98xf32, #tpu.memory_space<smem>>
    %116 = vector.broadcast %115 : f32 to vector<1x256xf32>
    %117 = arith.mulf %33, %116 : vector<1x256xf32>
    %118 = arith.addf %114, %117 : vector<1x256xf32>
    %119 = arith.addf %111, %118 : vector<1x256xf32>
    %c4 = arith.constant 4 : index
    %120 = memref.load %arg6[%c4] : memref<98xf32, #tpu.memory_space<smem>>
    %121 = vector.broadcast %120 : f32 to vector<1x256xf32>
    %122 = arith.mulf %68, %121 : vector<1x256xf32>
    %c53 = arith.constant 53 : index
    %123 = memref.load %arg6[%c53] : memref<98xf32, #tpu.memory_space<smem>>
    %124 = vector.broadcast %123 : f32 to vector<1x256xf32>
    %125 = arith.mulf %70, %124 : vector<1x256xf32>
    %126 = arith.addf %122, %125 : vector<1x256xf32>
    %127 = arith.addf %119, %126 : vector<1x256xf32>
    %c5 = arith.constant 5 : index
    %128 = memref.load %arg6[%c5] : memref<98xf32, #tpu.memory_space<smem>>
    %129 = vector.broadcast %128 : f32 to vector<1x256xf32>
    %130 = arith.mulf %76, %129 : vector<1x256xf32>
    %c54 = arith.constant 54 : index
    %131 = memref.load %arg6[%c54] : memref<98xf32, #tpu.memory_space<smem>>
    %132 = vector.broadcast %131 : f32 to vector<1x256xf32>
    %133 = arith.mulf %78, %132 : vector<1x256xf32>
    %134 = arith.addf %130, %133 : vector<1x256xf32>
    %135 = arith.addf %127, %134 : vector<1x256xf32>
    %c6 = arith.constant 6 : index
    %136 = memref.load %arg6[%c6] : memref<98xf32, #tpu.memory_space<smem>>
    %137 = vector.broadcast %136 : f32 to vector<1x256xf32>
    %138 = arith.mulf %84, %137 : vector<1x256xf32>
    %c55 = arith.constant 55 : index
    %139 = memref.load %arg6[%c55] : memref<98xf32, #tpu.memory_space<smem>>
    %140 = vector.broadcast %139 : f32 to vector<1x256xf32>
    %141 = arith.mulf %86, %140 : vector<1x256xf32>
    %142 = arith.addf %138, %141 : vector<1x256xf32>
    %143 = arith.addf %135, %142 : vector<1x256xf32>
    %c48_i32 = arith.constant 48 : i32
    %144 = tpu.dynamic_rotate %143 by %c48_i32 dim 1 : vector<1x256xf32>, i32 -> vector<1x256xf32>
    %c3_i32_42 = arith.constant 3 : i32
    %145 = vector.broadcast %c3_i32_42 : i32 to vector<1x256xi32>
    %146 = arith.cmpi sge, %36, %145 : vector<1x256xi32>
    %cst_43 = arith.constant 0.000000e+00 : f32
    %147 = vector.broadcast %cst_43 : f32 to vector<1x256xf32>
    %148 = arith.select %146, %144, %147 : vector<1x256xi1>, vector<1x256xf32>
    %149 = arith.addf %88, %148 : vector<1x256xf32>
    %c7 = arith.constant 7 : index
    %150 = memref.load %arg6[%c7] : memref<98xf32, #tpu.memory_space<smem>>
    %151 = vector.broadcast %150 : f32 to vector<1x256xf32>
    %152 = arith.mulf %44, %151 : vector<1x256xf32>
    %c56 = arith.constant 56 : index
    %153 = memref.load %arg6[%c56] : memref<98xf32, #tpu.memory_space<smem>>
    %154 = vector.broadcast %153 : f32 to vector<1x256xf32>
    %155 = arith.mulf %46, %154 : vector<1x256xf32>
    %156 = arith.addf %152, %155 : vector<1x256xf32>
    %c8 = arith.constant 8 : index
    %157 = memref.load %arg6[%c8] : memref<98xf32, #tpu.memory_space<smem>>
    %158 = vector.broadcast %157 : f32 to vector<1x256xf32>
    %159 = arith.mulf %52, %158 : vector<1x256xf32>
    %c57 = arith.constant 57 : index
    %160 = memref.load %arg6[%c57] : memref<98xf32, #tpu.memory_space<smem>>
    %161 = vector.broadcast %160 : f32 to vector<1x256xf32>
    %162 = arith.mulf %54, %161 : vector<1x256xf32>
    %163 = arith.addf %159, %162 : vector<1x256xf32>
    %164 = arith.addf %156, %163 : vector<1x256xf32>
    %c9 = arith.constant 9 : index
    %165 = memref.load %arg6[%c9] : memref<98xf32, #tpu.memory_space<smem>>
    %166 = vector.broadcast %165 : f32 to vector<1x256xf32>
    %167 = arith.mulf %60, %166 : vector<1x256xf32>
    %c58 = arith.constant 58 : index
    %168 = memref.load %arg6[%c58] : memref<98xf32, #tpu.memory_space<smem>>
    %169 = vector.broadcast %168 : f32 to vector<1x256xf32>
    %170 = arith.mulf %62, %169 : vector<1x256xf32>
    %171 = arith.addf %167, %170 : vector<1x256xf32>
    %172 = arith.addf %164, %171 : vector<1x256xf32>
    %c10 = arith.constant 10 : index
    %173 = memref.load %arg6[%c10] : memref<98xf32, #tpu.memory_space<smem>>
    %174 = vector.broadcast %173 : f32 to vector<1x256xf32>
    %175 = arith.mulf %29, %174 : vector<1x256xf32>
    %c59 = arith.constant 59 : index
    %176 = memref.load %arg6[%c59] : memref<98xf32, #tpu.memory_space<smem>>
    %177 = vector.broadcast %176 : f32 to vector<1x256xf32>
    %178 = arith.mulf %33, %177 : vector<1x256xf32>
    %179 = arith.addf %175, %178 : vector<1x256xf32>
    %180 = arith.addf %172, %179 : vector<1x256xf32>
    %c11 = arith.constant 11 : index
    %181 = memref.load %arg6[%c11] : memref<98xf32, #tpu.memory_space<smem>>
    %182 = vector.broadcast %181 : f32 to vector<1x256xf32>
    %183 = arith.mulf %68, %182 : vector<1x256xf32>
    %c60 = arith.constant 60 : index
    %184 = memref.load %arg6[%c60] : memref<98xf32, #tpu.memory_space<smem>>
    %185 = vector.broadcast %184 : f32 to vector<1x256xf32>
    %186 = arith.mulf %70, %185 : vector<1x256xf32>
    %187 = arith.addf %183, %186 : vector<1x256xf32>
    %188 = arith.addf %180, %187 : vector<1x256xf32>
    %c12 = arith.constant 12 : index
    %189 = memref.load %arg6[%c12] : memref<98xf32, #tpu.memory_space<smem>>
    %190 = vector.broadcast %189 : f32 to vector<1x256xf32>
    %191 = arith.mulf %76, %190 : vector<1x256xf32>
    %c61 = arith.constant 61 : index
    %192 = memref.load %arg6[%c61] : memref<98xf32, #tpu.memory_space<smem>>
    %193 = vector.broadcast %192 : f32 to vector<1x256xf32>
    %194 = arith.mulf %78, %193 : vector<1x256xf32>
    %195 = arith.addf %191, %194 : vector<1x256xf32>
    %196 = arith.addf %188, %195 : vector<1x256xf32>
    %c13 = arith.constant 13 : index
    %197 = memref.load %arg6[%c13] : memref<98xf32, #tpu.memory_space<smem>>
    %198 = vector.broadcast %197 : f32 to vector<1x256xf32>
    %199 = arith.mulf %84, %198 : vector<1x256xf32>
    %c62 = arith.constant 62 : index
    %200 = memref.load %arg6[%c62] : memref<98xf32, #tpu.memory_space<smem>>
    %201 = vector.broadcast %200 : f32 to vector<1x256xf32>
    %202 = arith.mulf %86, %201 : vector<1x256xf32>
    %203 = arith.addf %199, %202 : vector<1x256xf32>
    %204 = arith.addf %196, %203 : vector<1x256xf32>
    %c32_i32 = arith.constant 32 : i32
    %205 = tpu.dynamic_rotate %204 by %c32_i32 dim 1 : vector<1x256xf32>, i32 -> vector<1x256xf32>
    %c2_i32_44 = arith.constant 2 : i32
    %206 = vector.broadcast %c2_i32_44 : i32 to vector<1x256xi32>
    %207 = arith.cmpi sge, %36, %206 : vector<1x256xi32>
    %cst_45 = arith.constant 0.000000e+00 : f32
    %208 = vector.broadcast %cst_45 : f32 to vector<1x256xf32>
    %209 = arith.select %207, %205, %208 : vector<1x256xi1>, vector<1x256xf32>
    %210 = arith.addf %149, %209 : vector<1x256xf32>
    %c14 = arith.constant 14 : index
    %211 = memref.load %arg6[%c14] : memref<98xf32, #tpu.memory_space<smem>>
    %212 = vector.broadcast %211 : f32 to vector<1x256xf32>
    %213 = arith.mulf %44, %212 : vector<1x256xf32>
    %c63 = arith.constant 63 : index
    %214 = memref.load %arg6[%c63] : memref<98xf32, #tpu.memory_space<smem>>
    %215 = vector.broadcast %214 : f32 to vector<1x256xf32>
    %216 = arith.mulf %46, %215 : vector<1x256xf32>
    %217 = arith.addf %213, %216 : vector<1x256xf32>
    %c15 = arith.constant 15 : index
    %218 = memref.load %arg6[%c15] : memref<98xf32, #tpu.memory_space<smem>>
    %219 = vector.broadcast %218 : f32 to vector<1x256xf32>
    %220 = arith.mulf %52, %219 : vector<1x256xf32>
    %c64 = arith.constant 64 : index
    %221 = memref.load %arg6[%c64] : memref<98xf32, #tpu.memory_space<smem>>
    %222 = vector.broadcast %221 : f32 to vector<1x256xf32>
    %223 = arith.mulf %54, %222 : vector<1x256xf32>
    %224 = arith.addf %220, %223 : vector<1x256xf32>
    %225 = arith.addf %217, %224 : vector<1x256xf32>
    %c16 = arith.constant 16 : index
    %226 = memref.load %arg6[%c16] : memref<98xf32, #tpu.memory_space<smem>>
    %227 = vector.broadcast %226 : f32 to vector<1x256xf32>
    %228 = arith.mulf %60, %227 : vector<1x256xf32>
    %c65 = arith.constant 65 : index
    %229 = memref.load %arg6[%c65] : memref<98xf32, #tpu.memory_space<smem>>
    %230 = vector.broadcast %229 : f32 to vector<1x256xf32>
    %231 = arith.mulf %62, %230 : vector<1x256xf32>
    %232 = arith.addf %228, %231 : vector<1x256xf32>
    %233 = arith.addf %225, %232 : vector<1x256xf32>
    %c17 = arith.constant 17 : index
    %234 = memref.load %arg6[%c17] : memref<98xf32, #tpu.memory_space<smem>>
    %235 = vector.broadcast %234 : f32 to vector<1x256xf32>
    %236 = arith.mulf %29, %235 : vector<1x256xf32>
    %c66 = arith.constant 66 : index
    %237 = memref.load %arg6[%c66] : memref<98xf32, #tpu.memory_space<smem>>
    %238 = vector.broadcast %237 : f32 to vector<1x256xf32>
    %239 = arith.mulf %33, %238 : vector<1x256xf32>
    %240 = arith.addf %236, %239 : vector<1x256xf32>
    %241 = arith.addf %233, %240 : vector<1x256xf32>
    %c18 = arith.constant 18 : index
    %242 = memref.load %arg6[%c18] : memref<98xf32, #tpu.memory_space<smem>>
    %243 = vector.broadcast %242 : f32 to vector<1x256xf32>
    %244 = arith.mulf %68, %243 : vector<1x256xf32>
    %c67 = arith.constant 67 : index
    %245 = memref.load %arg6[%c67] : memref<98xf32, #tpu.memory_space<smem>>
    %246 = vector.broadcast %245 : f32 to vector<1x256xf32>
    %247 = arith.mulf %70, %246 : vector<1x256xf32>
    %248 = arith.addf %244, %247 : vector<1x256xf32>
    %249 = arith.addf %241, %248 : vector<1x256xf32>
    %c19 = arith.constant 19 : index
    %250 = memref.load %arg6[%c19] : memref<98xf32, #tpu.memory_space<smem>>
    %251 = vector.broadcast %250 : f32 to vector<1x256xf32>
    %252 = arith.mulf %76, %251 : vector<1x256xf32>
    %c68 = arith.constant 68 : index
    %253 = memref.load %arg6[%c68] : memref<98xf32, #tpu.memory_space<smem>>
    %254 = vector.broadcast %253 : f32 to vector<1x256xf32>
    %255 = arith.mulf %78, %254 : vector<1x256xf32>
    %256 = arith.addf %252, %255 : vector<1x256xf32>
    %257 = arith.addf %249, %256 : vector<1x256xf32>
    %c20 = arith.constant 20 : index
    %258 = memref.load %arg6[%c20] : memref<98xf32, #tpu.memory_space<smem>>
    %259 = vector.broadcast %258 : f32 to vector<1x256xf32>
    %260 = arith.mulf %84, %259 : vector<1x256xf32>
    %c69 = arith.constant 69 : index
    %261 = memref.load %arg6[%c69] : memref<98xf32, #tpu.memory_space<smem>>
    %262 = vector.broadcast %261 : f32 to vector<1x256xf32>
    %263 = arith.mulf %86, %262 : vector<1x256xf32>
    %264 = arith.addf %260, %263 : vector<1x256xf32>
    %265 = arith.addf %257, %264 : vector<1x256xf32>
    %c16_i32 = arith.constant 16 : i32
    %266 = tpu.dynamic_rotate %265 by %c16_i32 dim 1 : vector<1x256xf32>, i32 -> vector<1x256xf32>
    %c1_i32_46 = arith.constant 1 : i32
    %267 = vector.broadcast %c1_i32_46 : i32 to vector<1x256xi32>
    %268 = arith.cmpi sge, %36, %267 : vector<1x256xi32>
    %cst_47 = arith.constant 0.000000e+00 : f32
    %269 = vector.broadcast %cst_47 : f32 to vector<1x256xf32>
    %270 = arith.select %268, %266, %269 : vector<1x256xi1>, vector<1x256xf32>
    %271 = arith.addf %210, %270 : vector<1x256xf32>
    %c21 = arith.constant 21 : index
    %272 = memref.load %arg6[%c21] : memref<98xf32, #tpu.memory_space<smem>>
    %273 = vector.broadcast %272 : f32 to vector<1x256xf32>
    %274 = arith.mulf %44, %273 : vector<1x256xf32>
    %c70 = arith.constant 70 : index
    %275 = memref.load %arg6[%c70] : memref<98xf32, #tpu.memory_space<smem>>
    %276 = vector.broadcast %275 : f32 to vector<1x256xf32>
    %277 = arith.mulf %46, %276 : vector<1x256xf32>
    %278 = arith.addf %274, %277 : vector<1x256xf32>
    %c22 = arith.constant 22 : index
    %279 = memref.load %arg6[%c22] : memref<98xf32, #tpu.memory_space<smem>>
    %280 = vector.broadcast %279 : f32 to vector<1x256xf32>
    %281 = arith.mulf %52, %280 : vector<1x256xf32>
    %c71 = arith.constant 71 : index
    %282 = memref.load %arg6[%c71] : memref<98xf32, #tpu.memory_space<smem>>
    %283 = vector.broadcast %282 : f32 to vector<1x256xf32>
    %284 = arith.mulf %54, %283 : vector<1x256xf32>
    %285 = arith.addf %281, %284 : vector<1x256xf32>
    %286 = arith.addf %278, %285 : vector<1x256xf32>
    %c23 = arith.constant 23 : index
    %287 = memref.load %arg6[%c23] : memref<98xf32, #tpu.memory_space<smem>>
    %288 = vector.broadcast %287 : f32 to vector<1x256xf32>
    %289 = arith.mulf %60, %288 : vector<1x256xf32>
    %c72 = arith.constant 72 : index
    %290 = memref.load %arg6[%c72] : memref<98xf32, #tpu.memory_space<smem>>
    %291 = vector.broadcast %290 : f32 to vector<1x256xf32>
    %292 = arith.mulf %62, %291 : vector<1x256xf32>
    %293 = arith.addf %289, %292 : vector<1x256xf32>
    %294 = arith.addf %286, %293 : vector<1x256xf32>
    %c24 = arith.constant 24 : index
    %295 = memref.load %arg6[%c24] : memref<98xf32, #tpu.memory_space<smem>>
    %296 = vector.broadcast %295 : f32 to vector<1x256xf32>
    %297 = arith.mulf %29, %296 : vector<1x256xf32>
    %c73 = arith.constant 73 : index
    %298 = memref.load %arg6[%c73] : memref<98xf32, #tpu.memory_space<smem>>
    %299 = vector.broadcast %298 : f32 to vector<1x256xf32>
    %300 = arith.mulf %33, %299 : vector<1x256xf32>
    %301 = arith.addf %297, %300 : vector<1x256xf32>
    %302 = arith.addf %294, %301 : vector<1x256xf32>
    %c25 = arith.constant 25 : index
    %303 = memref.load %arg6[%c25] : memref<98xf32, #tpu.memory_space<smem>>
    %304 = vector.broadcast %303 : f32 to vector<1x256xf32>
    %305 = arith.mulf %68, %304 : vector<1x256xf32>
    %c74 = arith.constant 74 : index
    %306 = memref.load %arg6[%c74] : memref<98xf32, #tpu.memory_space<smem>>
    %307 = vector.broadcast %306 : f32 to vector<1x256xf32>
    %308 = arith.mulf %70, %307 : vector<1x256xf32>
    %309 = arith.addf %305, %308 : vector<1x256xf32>
    %310 = arith.addf %302, %309 : vector<1x256xf32>
    %c26 = arith.constant 26 : index
    %311 = memref.load %arg6[%c26] : memref<98xf32, #tpu.memory_space<smem>>
    %312 = vector.broadcast %311 : f32 to vector<1x256xf32>
    %313 = arith.mulf %76, %312 : vector<1x256xf32>
    %c75 = arith.constant 75 : index
    %314 = memref.load %arg6[%c75] : memref<98xf32, #tpu.memory_space<smem>>
    %315 = vector.broadcast %314 : f32 to vector<1x256xf32>
    %316 = arith.mulf %78, %315 : vector<1x256xf32>
    %317 = arith.addf %313, %316 : vector<1x256xf32>
    %318 = arith.addf %310, %317 : vector<1x256xf32>
    %c27 = arith.constant 27 : index
    %319 = memref.load %arg6[%c27] : memref<98xf32, #tpu.memory_space<smem>>
    %320 = vector.broadcast %319 : f32 to vector<1x256xf32>
    %321 = arith.mulf %84, %320 : vector<1x256xf32>
    %c76 = arith.constant 76 : index
    %322 = memref.load %arg6[%c76] : memref<98xf32, #tpu.memory_space<smem>>
    %323 = vector.broadcast %322 : f32 to vector<1x256xf32>
    %324 = arith.mulf %86, %323 : vector<1x256xf32>
    %325 = arith.addf %321, %324 : vector<1x256xf32>
    %326 = arith.addf %318, %325 : vector<1x256xf32>
    %327 = arith.addf %271, %326 : vector<1x256xf32>
    %c28 = arith.constant 28 : index
    %328 = memref.load %arg6[%c28] : memref<98xf32, #tpu.memory_space<smem>>
    %329 = vector.broadcast %328 : f32 to vector<1x256xf32>
    %330 = arith.mulf %44, %329 : vector<1x256xf32>
    %c77 = arith.constant 77 : index
    %331 = memref.load %arg6[%c77] : memref<98xf32, #tpu.memory_space<smem>>
    %332 = vector.broadcast %331 : f32 to vector<1x256xf32>
    %333 = arith.mulf %46, %332 : vector<1x256xf32>
    %334 = arith.addf %330, %333 : vector<1x256xf32>
    %c29 = arith.constant 29 : index
    %335 = memref.load %arg6[%c29] : memref<98xf32, #tpu.memory_space<smem>>
    %336 = vector.broadcast %335 : f32 to vector<1x256xf32>
    %337 = arith.mulf %52, %336 : vector<1x256xf32>
    %c78 = arith.constant 78 : index
    %338 = memref.load %arg6[%c78] : memref<98xf32, #tpu.memory_space<smem>>
    %339 = vector.broadcast %338 : f32 to vector<1x256xf32>
    %340 = arith.mulf %54, %339 : vector<1x256xf32>
    %341 = arith.addf %337, %340 : vector<1x256xf32>
    %342 = arith.addf %334, %341 : vector<1x256xf32>
    %c30 = arith.constant 30 : index
    %343 = memref.load %arg6[%c30] : memref<98xf32, #tpu.memory_space<smem>>
    %344 = vector.broadcast %343 : f32 to vector<1x256xf32>
    %345 = arith.mulf %60, %344 : vector<1x256xf32>
    %c79 = arith.constant 79 : index
    %346 = memref.load %arg6[%c79] : memref<98xf32, #tpu.memory_space<smem>>
    %347 = vector.broadcast %346 : f32 to vector<1x256xf32>
    %348 = arith.mulf %62, %347 : vector<1x256xf32>
    %349 = arith.addf %345, %348 : vector<1x256xf32>
    %350 = arith.addf %342, %349 : vector<1x256xf32>
    %c31 = arith.constant 31 : index
    %351 = memref.load %arg6[%c31] : memref<98xf32, #tpu.memory_space<smem>>
    %352 = vector.broadcast %351 : f32 to vector<1x256xf32>
    %353 = arith.mulf %29, %352 : vector<1x256xf32>
    %c80 = arith.constant 80 : index
    %354 = memref.load %arg6[%c80] : memref<98xf32, #tpu.memory_space<smem>>
    %355 = vector.broadcast %354 : f32 to vector<1x256xf32>
    %356 = arith.mulf %33, %355 : vector<1x256xf32>
    %357 = arith.addf %353, %356 : vector<1x256xf32>
    %358 = arith.addf %350, %357 : vector<1x256xf32>
    %c32 = arith.constant 32 : index
    %359 = memref.load %arg6[%c32] : memref<98xf32, #tpu.memory_space<smem>>
    %360 = vector.broadcast %359 : f32 to vector<1x256xf32>
    %361 = arith.mulf %68, %360 : vector<1x256xf32>
    %c81 = arith.constant 81 : index
    %362 = memref.load %arg6[%c81] : memref<98xf32, #tpu.memory_space<smem>>
    %363 = vector.broadcast %362 : f32 to vector<1x256xf32>
    %364 = arith.mulf %70, %363 : vector<1x256xf32>
    %365 = arith.addf %361, %364 : vector<1x256xf32>
    %366 = arith.addf %358, %365 : vector<1x256xf32>
    %c33 = arith.constant 33 : index
    %367 = memref.load %arg6[%c33] : memref<98xf32, #tpu.memory_space<smem>>
    %368 = vector.broadcast %367 : f32 to vector<1x256xf32>
    %369 = arith.mulf %76, %368 : vector<1x256xf32>
    %c82 = arith.constant 82 : index
    %370 = memref.load %arg6[%c82] : memref<98xf32, #tpu.memory_space<smem>>
    %371 = vector.broadcast %370 : f32 to vector<1x256xf32>
    %372 = arith.mulf %78, %371 : vector<1x256xf32>
    %373 = arith.addf %369, %372 : vector<1x256xf32>
    %374 = arith.addf %366, %373 : vector<1x256xf32>
    %c34 = arith.constant 34 : index
    %375 = memref.load %arg6[%c34] : memref<98xf32, #tpu.memory_space<smem>>
    %376 = vector.broadcast %375 : f32 to vector<1x256xf32>
    %377 = arith.mulf %84, %376 : vector<1x256xf32>
    %c83 = arith.constant 83 : index
    %378 = memref.load %arg6[%c83] : memref<98xf32, #tpu.memory_space<smem>>
    %379 = vector.broadcast %378 : f32 to vector<1x256xf32>
    %380 = arith.mulf %86, %379 : vector<1x256xf32>
    %381 = arith.addf %377, %380 : vector<1x256xf32>
    %382 = arith.addf %374, %381 : vector<1x256xf32>
    %c240_i32 = arith.constant 240 : i32
    %383 = tpu.dynamic_rotate %382 by %c240_i32 dim 1 : vector<1x256xf32>, i32 -> vector<1x256xf32>
    %c15_i32_48 = arith.constant 15 : i32
    %384 = vector.broadcast %c15_i32_48 : i32 to vector<1x256xi32>
    %385 = arith.cmpi slt, %36, %384 : vector<1x256xi32>
    %cst_49 = arith.constant 0.000000e+00 : f32
    %386 = vector.broadcast %cst_49 : f32 to vector<1x256xf32>
    %387 = arith.select %385, %383, %386 : vector<1x256xi1>, vector<1x256xf32>
    %388 = arith.addf %327, %387 : vector<1x256xf32>
    %c35 = arith.constant 35 : index
    %389 = memref.load %arg6[%c35] : memref<98xf32, #tpu.memory_space<smem>>
    %390 = vector.broadcast %389 : f32 to vector<1x256xf32>
    %391 = arith.mulf %44, %390 : vector<1x256xf32>
    %c84 = arith.constant 84 : index
    %392 = memref.load %arg6[%c84] : memref<98xf32, #tpu.memory_space<smem>>
    %393 = vector.broadcast %392 : f32 to vector<1x256xf32>
    %394 = arith.mulf %46, %393 : vector<1x256xf32>
    %395 = arith.addf %391, %394 : vector<1x256xf32>
    %c36 = arith.constant 36 : index
    %396 = memref.load %arg6[%c36] : memref<98xf32, #tpu.memory_space<smem>>
    %397 = vector.broadcast %396 : f32 to vector<1x256xf32>
    %398 = arith.mulf %52, %397 : vector<1x256xf32>
    %c85 = arith.constant 85 : index
    %399 = memref.load %arg6[%c85] : memref<98xf32, #tpu.memory_space<smem>>
    %400 = vector.broadcast %399 : f32 to vector<1x256xf32>
    %401 = arith.mulf %54, %400 : vector<1x256xf32>
    %402 = arith.addf %398, %401 : vector<1x256xf32>
    %403 = arith.addf %395, %402 : vector<1x256xf32>
    %c37 = arith.constant 37 : index
    %404 = memref.load %arg6[%c37] : memref<98xf32, #tpu.memory_space<smem>>
    %405 = vector.broadcast %404 : f32 to vector<1x256xf32>
    %406 = arith.mulf %60, %405 : vector<1x256xf32>
    %c86 = arith.constant 86 : index
    %407 = memref.load %arg6[%c86] : memref<98xf32, #tpu.memory_space<smem>>
    %408 = vector.broadcast %407 : f32 to vector<1x256xf32>
    %409 = arith.mulf %62, %408 : vector<1x256xf32>
    %410 = arith.addf %406, %409 : vector<1x256xf32>
    %411 = arith.addf %403, %410 : vector<1x256xf32>
    %c38 = arith.constant 38 : index
    %412 = memref.load %arg6[%c38] : memref<98xf32, #tpu.memory_space<smem>>
    %413 = vector.broadcast %412 : f32 to vector<1x256xf32>
    %414 = arith.mulf %29, %413 : vector<1x256xf32>
    %c87 = arith.constant 87 : index
    %415 = memref.load %arg6[%c87] : memref<98xf32, #tpu.memory_space<smem>>
    %416 = vector.broadcast %415 : f32 to vector<1x256xf32>
    %417 = arith.mulf %33, %416 : vector<1x256xf32>
    %418 = arith.addf %414, %417 : vector<1x256xf32>
    %419 = arith.addf %411, %418 : vector<1x256xf32>
    %c39 = arith.constant 39 : index
    %420 = memref.load %arg6[%c39] : memref<98xf32, #tpu.memory_space<smem>>
    %421 = vector.broadcast %420 : f32 to vector<1x256xf32>
    %422 = arith.mulf %68, %421 : vector<1x256xf32>
    %c88 = arith.constant 88 : index
    %423 = memref.load %arg6[%c88] : memref<98xf32, #tpu.memory_space<smem>>
    %424 = vector.broadcast %423 : f32 to vector<1x256xf32>
    %425 = arith.mulf %70, %424 : vector<1x256xf32>
    %426 = arith.addf %422, %425 : vector<1x256xf32>
    %427 = arith.addf %419, %426 : vector<1x256xf32>
    %c40 = arith.constant 40 : index
    %428 = memref.load %arg6[%c40] : memref<98xf32, #tpu.memory_space<smem>>
    %429 = vector.broadcast %428 : f32 to vector<1x256xf32>
    %430 = arith.mulf %76, %429 : vector<1x256xf32>
    %c89 = arith.constant 89 : index
    %431 = memref.load %arg6[%c89] : memref<98xf32, #tpu.memory_space<smem>>
    %432 = vector.broadcast %431 : f32 to vector<1x256xf32>
    %433 = arith.mulf %78, %432 : vector<1x256xf32>
    %434 = arith.addf %430, %433 : vector<1x256xf32>
    %435 = arith.addf %427, %434 : vector<1x256xf32>
    %c41 = arith.constant 41 : index
    %436 = memref.load %arg6[%c41] : memref<98xf32, #tpu.memory_space<smem>>
    %437 = vector.broadcast %436 : f32 to vector<1x256xf32>
    %438 = arith.mulf %84, %437 : vector<1x256xf32>
    %c90 = arith.constant 90 : index
    %439 = memref.load %arg6[%c90] : memref<98xf32, #tpu.memory_space<smem>>
    %440 = vector.broadcast %439 : f32 to vector<1x256xf32>
    %441 = arith.mulf %86, %440 : vector<1x256xf32>
    %442 = arith.addf %438, %441 : vector<1x256xf32>
    %443 = arith.addf %435, %442 : vector<1x256xf32>
    %c224_i32 = arith.constant 224 : i32
    %444 = tpu.dynamic_rotate %443 by %c224_i32 dim 1 : vector<1x256xf32>, i32 -> vector<1x256xf32>
    %c14_i32_50 = arith.constant 14 : i32
    %445 = vector.broadcast %c14_i32_50 : i32 to vector<1x256xi32>
    %446 = arith.cmpi slt, %36, %445 : vector<1x256xi32>
    %cst_51 = arith.constant 0.000000e+00 : f32
    %447 = vector.broadcast %cst_51 : f32 to vector<1x256xf32>
    %448 = arith.select %446, %444, %447 : vector<1x256xi1>, vector<1x256xf32>
    %449 = arith.addf %388, %448 : vector<1x256xf32>
    %c42 = arith.constant 42 : index
    %450 = memref.load %arg6[%c42] : memref<98xf32, #tpu.memory_space<smem>>
    %451 = vector.broadcast %450 : f32 to vector<1x256xf32>
    %452 = arith.mulf %44, %451 : vector<1x256xf32>
    %c91 = arith.constant 91 : index
    %453 = memref.load %arg6[%c91] : memref<98xf32, #tpu.memory_space<smem>>
    %454 = vector.broadcast %453 : f32 to vector<1x256xf32>
    %455 = arith.mulf %46, %454 : vector<1x256xf32>
    %456 = arith.addf %452, %455 : vector<1x256xf32>
    %c43 = arith.constant 43 : index
    %457 = memref.load %arg6[%c43] : memref<98xf32, #tpu.memory_space<smem>>
    %458 = vector.broadcast %457 : f32 to vector<1x256xf32>
    %459 = arith.mulf %52, %458 : vector<1x256xf32>
    %c92 = arith.constant 92 : index
    %460 = memref.load %arg6[%c92] : memref<98xf32, #tpu.memory_space<smem>>
    %461 = vector.broadcast %460 : f32 to vector<1x256xf32>
    %462 = arith.mulf %54, %461 : vector<1x256xf32>
    %463 = arith.addf %459, %462 : vector<1x256xf32>
    %464 = arith.addf %456, %463 : vector<1x256xf32>
    %c44 = arith.constant 44 : index
    %465 = memref.load %arg6[%c44] : memref<98xf32, #tpu.memory_space<smem>>
    %466 = vector.broadcast %465 : f32 to vector<1x256xf32>
    %467 = arith.mulf %60, %466 : vector<1x256xf32>
    %c93 = arith.constant 93 : index
    %468 = memref.load %arg6[%c93] : memref<98xf32, #tpu.memory_space<smem>>
    %469 = vector.broadcast %468 : f32 to vector<1x256xf32>
    %470 = arith.mulf %62, %469 : vector<1x256xf32>
    %471 = arith.addf %467, %470 : vector<1x256xf32>
    %472 = arith.addf %464, %471 : vector<1x256xf32>
    %c45 = arith.constant 45 : index
    %473 = memref.load %arg6[%c45] : memref<98xf32, #tpu.memory_space<smem>>
    %474 = vector.broadcast %473 : f32 to vector<1x256xf32>
    %475 = arith.mulf %29, %474 : vector<1x256xf32>
    %c94 = arith.constant 94 : index
    %476 = memref.load %arg6[%c94] : memref<98xf32, #tpu.memory_space<smem>>
    %477 = vector.broadcast %476 : f32 to vector<1x256xf32>
    %478 = arith.mulf %33, %477 : vector<1x256xf32>
    %479 = arith.addf %475, %478 : vector<1x256xf32>
    %480 = arith.addf %472, %479 : vector<1x256xf32>
    %c46 = arith.constant 46 : index
    %481 = memref.load %arg6[%c46] : memref<98xf32, #tpu.memory_space<smem>>
    %482 = vector.broadcast %481 : f32 to vector<1x256xf32>
    %483 = arith.mulf %68, %482 : vector<1x256xf32>
    %c95 = arith.constant 95 : index
    %484 = memref.load %arg6[%c95] : memref<98xf32, #tpu.memory_space<smem>>
    %485 = vector.broadcast %484 : f32 to vector<1x256xf32>
    %486 = arith.mulf %70, %485 : vector<1x256xf32>
    %487 = arith.addf %483, %486 : vector<1x256xf32>
    %488 = arith.addf %480, %487 : vector<1x256xf32>
    %c47 = arith.constant 47 : index
    %489 = memref.load %arg6[%c47] : memref<98xf32, #tpu.memory_space<smem>>
    %490 = vector.broadcast %489 : f32 to vector<1x256xf32>
    %491 = arith.mulf %76, %490 : vector<1x256xf32>
    %c96 = arith.constant 96 : index
    %492 = memref.load %arg6[%c96] : memref<98xf32, #tpu.memory_space<smem>>
    %493 = vector.broadcast %492 : f32 to vector<1x256xf32>
    %494 = arith.mulf %78, %493 : vector<1x256xf32>
    %495 = arith.addf %491, %494 : vector<1x256xf32>
    %496 = arith.addf %488, %495 : vector<1x256xf32>
    %c48 = arith.constant 48 : index
    %497 = memref.load %arg6[%c48] : memref<98xf32, #tpu.memory_space<smem>>
    %498 = vector.broadcast %497 : f32 to vector<1x256xf32>
    %499 = arith.mulf %84, %498 : vector<1x256xf32>
    %c97 = arith.constant 97 : index
    %500 = memref.load %arg6[%c97] : memref<98xf32, #tpu.memory_space<smem>>
    %501 = vector.broadcast %500 : f32 to vector<1x256xf32>
    %502 = arith.mulf %86, %501 : vector<1x256xf32>
    %503 = arith.addf %499, %502 : vector<1x256xf32>
    %504 = arith.addf %496, %503 : vector<1x256xf32>
    %c208_i32 = arith.constant 208 : i32
    %505 = tpu.dynamic_rotate %504 by %c208_i32 dim 1 : vector<1x256xf32>, i32 -> vector<1x256xf32>
    %c13_i32_52 = arith.constant 13 : i32
    %506 = vector.broadcast %c13_i32_52 : i32 to vector<1x256xi32>
    %507 = arith.cmpi slt, %36, %506 : vector<1x256xi32>
    %cst_53 = arith.constant 0.000000e+00 : f32
    %508 = vector.broadcast %cst_53 : f32 to vector<1x256xf32>
    %509 = arith.select %507, %505, %508 : vector<1x256xi1>, vector<1x256xf32>
    %510 = arith.addf %449, %509 : vector<1x256xf32>
    %511 = arith.negf %510 : vector<1x256xf32>
    %512 = math.exp %511 : vector<1x256xf32>
    %cst_54 = arith.constant 1.000000e+00 : f32
    %513 = vector.broadcast %cst_54 : f32 to vector<1x256xf32>
    %514 = arith.addf %513, %512 : vector<1x256xf32>
    %515 = arith.divf %513, %514 : vector<1x256xf32>
    %516 = vector.broadcast %515 : vector<1x256xf32> to vector<4x256xf32>
    %517 = arith.mulf %27, %516 : vector<4x256xf32>
    %c0_55 = arith.constant 0 : index
    %c0_56 = arith.constant 0 : index
    %c0_57 = arith.constant 0 : index
    %518 = vector.load %arg8[%c0_55, %c0_56, %c0_57] : memref<1x4x256xf32, #tpu.memory_space<vmem>>, vector<1x4x256xf32>
    %519 = vector.shape_cast %518 : vector<1x4x256xf32> to vector<4x256xf32>
    %520 = vector.shape_cast %517 : vector<4x256xf32> to vector<1x4x256xf32>
    tpu.vector_store %arg8[%c0_55, %c0_56, %c0_57], %520 {strides = array<i32>} : memref<1x4x256xf32, #tpu.memory_space<vmem>>, vector<1x4x256xf32>,
    return
  }
  func.func @transform_0(%arg0: i32) -> (i32, i32, i32) {
    %c0_i32 = arith.constant 0 : i32
    %c0_i32_0 = arith.constant 0 : i32
    %c0_i32_1 = arith.constant 0 : i32
    return %arg0, %c0_i32, %c0_i32_0 : i32, i32, i32
  }
  func.func @transform_1(%arg0: i32) -> (i32, i32) {
    %c0_i32 = arith.constant 0 : i32
    %c0_i32_0 = arith.constant 0 : i32
    %c0_i32_1 = arith.constant 0 : i32
    return %c0_i32, %c0_i32_0 : i32, i32
  }
  func.func @transform_2(%arg0: i32) -> (i32, i32) {
    %c0_i32 = arith.constant 0 : i32
    %c0_i32_0 = arith.constant 0 : i32
    %c0_i32_1 = arith.constant 0 : i32
    return %c0_i32, %c0_i32_0 : i32, i32
  }
  func.func @transform_3(%arg0: i32) -> (i32, i32) {
    %c0_i32 = arith.constant 0 : i32
    %c0_i32_0 = arith.constant 0 : i32
    %c0_i32_1 = arith.constant 0 : i32
    return %c0_i32, %c0_i32_0 : i32, i32
  }
  func.func @transform_4(%arg0: i32) -> (i32, i32) {
    %c0_i32 = arith.constant 0 : i32
    %c0_i32_0 = arith.constant 0 : i32
    %c0_i32_1 = arith.constant 0 : i32
    return %c0_i32, %c0_i32_0 : i32, i32
  }
  func.func @transform_5(%arg0: i32) -> i32 {
    %c0_i32 = arith.constant 0 : i32
    %c0_i32_0 = arith.constant 0 : i32
    return %c0_i32 : i32
  }
  func.func @transform_6(%arg0: i32) -> i32 {
    %c0_i32 = arith.constant 0 : i32
    %c0_i32_0 = arith.constant 0 : i32
    return %c0_i32 : i32
  }
  func.func @transform_7(%arg0: i32) -> (i32, i32, i32) {
    %c0_i32 = arith.constant 0 : i32
    %c0_i32_0 = arith.constant 0 : i32
    %c0_i32_1 = arith.constant 0 : i32
    return %arg0, %c0_i32, %c0_i32_0 : i32, i32, i32
  }
}

</mosaic_0001>

<llo_original>
// kernel: tpu_custom_call.1
$region0: #{tpu_custom_call.1}
  #allocation0 [shape = 'u32[]', space=smem, size = 0x4, offset = 0x4, fixed_abs, tag = 'smem constant byte address 0x4 - core index']
  #allocation1 [shape = 'u32[144,128]{1,0:T(1,128)}', space=vmem, size = 0x12000, scoped, tag = 'internal scratch']
  #allocation2 [shape = 'f32[1,1]{1,0:T(1,128)S(1)}', space=vmem, size = 0x200, scoped, tag = 'scoped memory for tpu_custom_call.1']
  #allocation3 [shape = 'f32[1]{0:T(128)S(6)}', space=smem, size = 0x200, scoped, tag = 'scoped memory for tpu_custom_call.1']
  %s0 = inlined_call_operand.vmem [shape: f32[2,4,256], index: 0, kind: input, shape index: {}]
  %s1 = inlined_call_operand.vmem [shape: f32[4,1], index: 1, kind: input, shape index: {}]
  %s2 = inlined_call_operand.<no memory space> [shape: f32[1,1], index: 2, kind: input, shape index: {}]
  %s3 = inlined_call_operand.vmem [shape: f32[4,1], index: 3, kind: input, shape index: {}]
  %s4 = inlined_call_operand.vmem [shape: f32[4,1], index: 4, kind: input, shape index: {}]
  %s5 = inlined_call_operand.vmem [shape: f32[98], index: 5, kind: input, shape index: {}]
  %s6 = inlined_call_operand.<no memory space> [shape: f32[1], index: 6, kind: input, shape index: {}]
  %s7 = inlined_call_operand.hbm [shape: f32[2,4,256], index: 7, kind: output, shape index: {}]
  %s8 = sld [smem:[#allocation0]]
  $region65: #{tpu_custom_call.1} parent=0
    _
  %s10 = ssub.s32 1, %s8
  %s11 = scalar_select 0, %s10, %s8
  %v12 = vstv %s2
  %13 = vst [vmem:[#allocation2] sm:$0x1] %v12
  %14 = sst [smem:[#allocation3]] %s6
  $region1: #{tpu_custom_call.1} parent=0
    #allocation4 [shape = 'u8[512]{0}', space=smem, size = 0x200, scoped, tag = 'input window, operand 5, single buffered']
    #allocation5 [shape = 's32[2]{0}', space=sflag, size = 0x8, scoped, tag = 'scoped memory for tpu_custom_call.1']
    #allocation6 [shape = 's32[2]{0}', space=sflag, size = 0x8, scoped, tag = 'scoped memory for tpu_custom_call.1']
    #allocation7 [shape = 'u8[8192]{0}', space=vmem, size = 0x2000, scoped, tag = 'output window, operand 0']
    %15 = vsyncpa [#allocation6], 0
    %16 = vsyncpa [#allocation5], 0
    %s17 = scalar_lea.sflag [#allocation5], 1
    %18 = vsyncpa %s17, 0
    loop: start=0, step=1, limit=4
    $region2: #{tpu_custom_call.1} parent=1 // loop_pre_header
      _
    $region3: #{tpu_custom_call.1} parent=1 // loop_header
      %s20 = sphi 0, %s24
      %p21 = scmp.ge.s32.totalorder %s20, 4
      %s30 = sphi 0, %s32
      %s33 = sphi 0, %s30
      %s34 = sphi 0, %s33
      %s50 = sphi 0, %s34
      %s54 = sphi 0, %s54
      %s56 = sphi 0, %s54
      %s57 = sphi 0, %s56
      %s71 = sphi 0, %s57
      %s75 = sphi 0, %s75
      %s77 = sphi 0, %s75
      %s78 = sphi 0, %s77
      %s92 = sphi 0, %s78
      %s96 = sphi 0, %s96
      %s98 = sphi 0, %s96
      %s99 = sphi 0, %s98
      %s113 = sphi 0, %s99
      %s117 = sphi 0, %s117
      %s119 = sphi 0, %s117
      %s120 = sphi 0, %s119
      %s134 = sphi 0, %s120
      %s138 = sphi 0, %s138
      %s140 = sphi 0, %s138
      %s141 = sphi 0, %s140
      %s155 = sphi 0, %s141
      %s159 = sphi 0, %s159
      %s161 = sphi 0, %s159
      %s162 = sphi 0, %s161
      %s176 = sphi 0, %s162
      %s182 = sphi 0, %s184
      %s185 = sphi 0, %s182
      %s186 = sphi 0, %s185
      %s202 = sphi 0, %s186
    $region4: #{tpu_custom_call.1} parent=1 // loop_header_branch
      %23 = sbr.rel (%p21) target = $region8
    $region5: #{tpu_custom_call.1} parent=1 // loop_body
      %s25 = ssub.s32 %s20, 1
      %s26 = ssub.s32 %s20, 2
      %s27 = sadd.s32 %s20, 1
      %s28 = ssub.s32 %s20, %s27
      %p29 = scmp.eq.s32.totalorder %s28, 0
      %s31 = sadd.s32 %s30, 1
      %s32 = scalar_select %p29, %s30, %s31
      %p35 = pneg %p29
      %p36 = scmp.eq.s32.totalorder %s20, 1
      %p37 = por %p35, %p36
      %p38 = scmp.ne.s32.totalorder %s30, %s33
      %p39 = scmp.eq.s32.totalorder %s20, 0
      %p40 = por %p38, %p39
      %p41 = scmp.ne.s32.totalorder %s30, %s33
      %p42 = scmp.eq.s32.totalorder %s25, 1
      %p43 = por %p41, %p42
      %p44 = scmp.ne.s32.totalorder %s33, %s34
      %p45 = scmp.eq.s32.totalorder %s25, 0
      %p46 = por %p44, %p45
      %p47 = scmp.ne.s32.totalorder %s33, %s34
      %p48 = scmp.eq.s32.totalorder %s26, 1
      %p49 = por %p47, %p48
      %p51 = scmp.ne.s32.totalorder %s34, %s50
      %p52 = scmp.eq.s32.totalorder %s26, 0
      %p53 = por %p51, %p52
      %s55 = sadd.s32 %s54, 1
      %p58 = scmp.eq.s32.totalorder %s20, 1
      %p59 = scmp.ne.s32.totalorder %s54, %s56
      %p60 = scmp.eq.s32.totalorder %s20, 0
      %p61 = por %p59, %p60
      %p62 = scmp.ne.s32.totalorder %s54, %s56
      %p63 = scmp.eq.s32.totalorder %s25, 1
      %p64 = por %p62, %p63
      %p65 = scmp.ne.s32.totalorder %s56, %s57
      %p66 = scmp.eq.s32.totalorder %s25, 0
      %p67 = por %p65, %p66
      %p68 = scmp.ne.s32.totalorder %s56, %s57
      %p69 = scmp.eq.s32.totalorder %s26, 1
      %p70 = por %p68, %p69
      %p72 = scmp.ne.s32.totalorder %s57, %s71
      %p73 = scmp.eq.s32.totalorder %s26, 0
      %p74 = por %p72, %p73
      %s76 = sadd.s32 %s75, 1
      %p79 = scmp.eq.s32.totalorder %s20, 1
      %p80 = scmp.ne.s32.totalorder %s75, %s77
      %p81 = scmp.eq.s32.totalorder %s20, 0
      %p82 = por %p80, %p81
      %p83 = scmp.ne.s32.totalorder %s75, %s77
      %p84 = scmp.eq.s32.totalorder %s25, 1
      %p85 = por %p83, %p84
      %p86 = scmp.ne.s32.totalorder %s77, %s78
      %p87 = scmp.eq.s32.totalorder %s25, 0
      %p88 = por %p86, %p87
      %p89 = scmp.ne.s32.totalorder %s77, %s78
      %p90 = scmp.eq.s32.totalorder %s26, 1
      %p91 = por %p89, %p90
      %p93 = scmp.ne.s32.totalorder %s78, %s92
      %p94 = scmp.eq.s32.totalorder %s26, 0
      %p95 = por %p93, %p94
      %s97 = sadd.s32 %s96, 1
      %p100 = scmp.eq.s32.totalorder %s20, 1
      %p101 = scmp.ne.s32.totalorder %s96, %s98
      %p102 = scmp.eq.s32.totalorder %s20, 0
      %p103 = por %p101, %p102
      %p104 = scmp.ne.s32.totalorder %s96, %s98
      %p105 = scmp.eq.s32.totalorder %s25, 1
      %p106 = por %p104, %p105
      %p107 = scmp.ne.s32.totalorder %s98, %s99
      %p108 = scmp.eq.s32.totalorder %s25, 0
      %p109 = por %p107, %p108
      %p110 = scmp.ne.s32.totalorder %s98, %s99
      %p111 = scmp.eq.s32.totalorder %s26, 1
      %p112 = por %p110, %p111
      %p114 = scmp.ne.s32.totalorder %s99, %s113
      %p115 = scmp.eq.s32.totalorder %s26, 0
      %p116 = por %p114, %p115
      %s118 = sadd.s32 %s117, 1
      %p121 = scmp.eq.s32.totalorder %s20, 1
      %p122 = scmp.ne.s32.totalorder %s117, %s119
      %p123 = scmp.eq.s32.totalorder %s20, 0
      %p124 = por %p122, %p123
      %p125 = scmp.ne.s32.totalorder %s117, %s119
      %p126 = scmp.eq.s32.totalorder %s25, 1
      %p127 = por %p125, %p126
      %p128 = scmp.ne.s32.totalorder %s119, %s120
      %p129 = scmp.eq.s32.totalorder %s25, 0
      %p130 = por %p128, %p129
      %p131 = scmp.ne.s32.totalorder %s119, %s120
      %p132 = scmp.eq.s32.totalorder %s26, 1
      %p133 = por %p131, %p132
      %p135 = scmp.ne.s32.totalorder %s120, %s134
      %p136 = scmp.eq.s32.totalorder %s26, 0
      %p137 = por %p135, %p136
      %s139 = sadd.s32 %s138, 1
      %p142 = scmp.eq.s32.totalorder %s20, 1
      %p143 = scmp.ne.s32.totalorder %s138, %s140
      %p144 = scmp.eq.s32.totalorder %s20, 0
      %p145 = por %p143, %p144
      %p146 = scmp.ne.s32.totalorder %s138, %s140
      %p147 = scmp.eq.s32.totalorder %s25, 1
      %p148 = por %p146, %p147
      %p149 = scmp.ne.s32.totalorder %s140, %s141
      %p150 = scmp.eq.s32.totalorder %s25, 0
      %p151 = por %p149, %p150
      %p152 = scmp.ne.s32.totalorder %s140, %s141
      %p153 = scmp.eq.s32.totalorder %s26, 1
      %p154 = por %p152, %p153
      %p156 = scmp.ne.s32.totalorder %s141, %s155
      %p157 = scmp.eq.s32.totalorder %s26, 0
      %p158 = por %p156, %p157
      %s160 = sadd.s32 %s159, 1
      %p163 = scmp.eq.s32.totalorder %s20, 1
      %p164 = scmp.ne.s32.totalorder %s159, %s161
      %p165 = scmp.eq.s32.totalorder %s20, 0
      %p166 = por %p164, %p165
      %p167 = scmp.ne.s32.totalorder %s159, %s161
      %p168 = scmp.eq.s32.totalorder %s25, 1
      %p169 = por %p167, %p168
      %p170 = scmp.ne.s32.totalorder %s161, %s162
      %p171 = scmp.eq.s32.totalorder %s25, 0
      %p172 = por %p170, %p171
      %p173 = scmp.ne.s32.totalorder %s161, %s162
      %p174 = scmp.eq.s32.totalorder %s26, 1
      %p175 = por %p173, %p174
      %p177 = scmp.ne.s32.totalorder %s162, %s176
      %p178 = scmp.eq.s32.totalorder %s26, 0
      %p179 = por %p177, %p178
      %s180 = ssub.s32 %s20, %s27
      %p181 = scmp.eq.s32.totalorder %s180, 0
      %s183 = sadd.s32 %s182, 1
      %s184 = scalar_select %p181, %s182, %s183
      %p187 = pneg %p181
      %p188 = scmp.eq.s32.totalorder %s20, 1
      %p189 = por %p187, %p188
      %p190 = scmp.ne.s32.totalorder %s182, %s185
      %p191 = scmp.eq.s32.totalorder %s20, 0
      %p192 = por %p190, %p191
      %p193 = scmp.ne.s32.totalorder %s182, %s185
      %p194 = scmp.eq.s32.totalorder %s25, 1
      %p195 = por %p193, %p194
      %p196 = scmp.ne.s32.totalorder %s185, %s186
      %p197 = scmp.eq.s32.totalorder %s25, 0
      %p198 = por %p196, %p197
      %p199 = scmp.ne.s32.totalorder %s185, %s186
      %p200 = scmp.eq.s32.totalorder %s26, 1
      %p201 = por %p199, %p200
      %p203 = scmp.ne.s32.totalorder %s186, %s202
      %p204 = scmp.eq.s32.totalorder %s26, 0
      %p205 = por %p203, %p204
      %p206 = scmp.le.s32.totalorder 1, %s20
      %p207 = scmp.lt.s32.totalorder %s20, 3
      %p208 = pnand %p206, %p207
      %p209 = pneg %p208
      // Predicated region
      $region9: #{tpu_custom_call.1} parent=5 // pred_check
        _
      $region10: #{tpu_custom_call.1} parent=5 // pred_check_branch
        %211 = sbr.rel (%p208) target = $region12
      $region11: #{tpu_custom_call.1} parent=5 // pred_region
        %s212 = ssub.s32 %s20, 1
        // Predicated region
        $region13: #{tpu_custom_call.1} parent=11 // pred_check
          %p213 = pneg %p67
        $region14: #{tpu_custom_call.1} parent=11 // pred_check_branch
          %215 = sbr.rel (%p213) target = $region16
        $region15: #{tpu_custom_call.1} parent=11 // pred_region
          _
        $region16: #{tpu_custom_call.1} parent=11 // pred_fallthru
          _
        // Predicated region
        $region17: #{tpu_custom_call.1} parent=11 // pred_check
          %p216 = pneg %p88
        $region18: #{tpu_custom_call.1} parent=11 // pred_check_branch
          %218 = sbr.rel (%p216) target = $region20
        $region19: #{tpu_custom_call.1} parent=11 // pred_region
          _
        $region20: #{tpu_custom_call.1} parent=11 // pred_fallthru
          _
        // Predicated region
        $region21: #{tpu_custom_call.1} parent=11 // pred_check
          %p219 = pneg %p109
        $region22: #{tpu_custom_call.1} parent=11 // pred_check_branch
          %221 = sbr.rel (%p219) target = $region24
        $region23: #{tpu_custom_call.1} parent=11 // pred_region
          _
        $region24: #{tpu_custom_call.1} parent=11 // pred_fallthru
          _
        // Predicated region
        $region25: #{tpu_custom_call.1} parent=11 // pred_check
          %p222 = pneg %p130
        $region26: #{tpu_custom_call.1} parent=11 // pred_check_branch
          %224 = sbr.rel (%p222) target = $region28
        $region27: #{tpu_custom_call.1} parent=11 // pred_region
          _
        $region28: #{tpu_custom_call.1} parent=11 // pred_fallthru
          _
        // Predicated region
        $region29: #{tpu_custom_call.1} parent=11 // pred_check
          %p225 = pneg %p151
        $region30: #{tpu_custom_call.1} parent=11 // pred_check_branch
          %227 = sbr.rel (%p225) target = $region32
        $region31: #{tpu_custom_call.1} parent=11 // pred_region
          %s229 = ssub.s32 16, 16
          %230 = vsyncadd [#allocation6], %s229
          %s232 = sshll.u32 %s5, 4
          %s233 = int_to_ptr.vmem [resolvable:$true] %s232
          %235 = dma.vmem_to_smem %s233, 16, [#allocation4], [#allocation6]
        $region32: #{tpu_custom_call.1} parent=11 // pred_fallthru
          _
        // Predicated region
        $region33: #{tpu_custom_call.1} parent=11 // pred_check
          %p236 = pneg %p172
        $region34: #{tpu_custom_call.1} parent=11 // pred_check_branch
          %238 = sbr.rel (%p236) target = $region36
        $region35: #{tpu_custom_call.1} parent=11 // pred_region
          _
        $region36: #{tpu_custom_call.1} parent=11 // pred_fallthru
          _
      $region12: #{tpu_custom_call.1} parent=5 // pred_fallthru
        _
      %p239 = scmp.lt.s32.totalorder %s20, 2
      // Predicated region
      $region37: #{tpu_custom_call.1} parent=5 // pred_check
        %p240 = pneg %p239
      $region38: #{tpu_custom_call.1} parent=5 // pred_check_branch
        %242 = sbr.rel (%p240) target = $region40
      $region39: #{tpu_custom_call.1} parent=5 // pred_region
        // Predicated region
        $region41: #{tpu_custom_call.1} parent=39 // pred_check
          %p243 = pneg %p40
        $region42: #{tpu_custom_call.1} parent=39 // pred_check_branch
          %245 = sbr.rel (%p243) target = $region44
        $region43: #{tpu_custom_call.1} parent=39 // pred_region
          %p246 = scmp.lt.s32.totalorder %s20, 1
          %s247 = scalar_select %p246, %s20, 1
          %s248 = smul.addr %s247, 2
          %s249 = smul.addr %s248, 4
          %s250 = scalar_lea.vmem %s0, %s249
        $region44: #{tpu_custom_call.1} parent=39 // pred_fallthru
          _
      $region40: #{tpu_custom_call.1} parent=5 // pred_fallthru
        _
      %p251 = scmp.le.s32.totalorder 1, %s20
      %p252 = scmp.lt.s32.totalorder %s20, 3
      %p253 = pnand %p251, %p252
      %p254 = pneg %p253
      // Predicated region
      $region45: #{tpu_custom_call.1} parent=5 // pred_check
        _
      $region46: #{tpu_custom_call.1} parent=5 // pred_check_branch
        %256 = sbr.rel (%p253) target = $region48
      $region47: #{tpu_custom_call.1} parent=5 // pred_region
        %s257 = ssub.s32 %s20, 1
        // Predicated region
        $region49: #{tpu_custom_call.1} parent=47 // pred_check
          %p258 = pneg %p151
        $region50: #{tpu_custom_call.1} parent=47 // pred_check_branch
          %260 = sbr.rel (%p258) target = $region52
        $region51: #{tpu_custom_call.1} parent=47 // pred_region
          %261 = dma.done [#allocation6], 16
        $region52: #{tpu_custom_call.1} parent=47 // pred_fallthru
          _
        %262 = sfence
        %p263 = scmp.lt.s32.totalorder %s25, 1
        %s264 = scalar_select %p263, %s25, 1
        %s265 = smul.addr %s264, 2
        %s266 = smul.addr %s265, 4
        %s267 = scalar_lea.vmem %s0, %s266
        %p268 = pneg %p46
        %p269 = pneg %p43
        %p270 = pneg %p67
        %p271 = pneg %p64
        %p272 = pneg %p88
        %p273 = pneg %p85
        %p274 = pneg %p109
        %p275 = pneg %p106
        %p276 = pneg %p130
        %p277 = pneg %p127
        %p278 = pneg %p151
        %p279 = pneg %p148
        %p280 = pneg %p172
        %p281 = pneg %p169
        %p282 = pneg %p198
        %p283 = pneg %p195
        %s284 = sand.u32 %s185, 1
        %s285 = scalar_lea.sflag [#allocation5], %s284
        %s286 = sand.u32 %s185, 1
        %s287 = smul.addr %s286, 8
        %s288 = scalar_lea.vmem [#allocation7], %s287
        %p289 = scmp.lt.s32.totalorder %s25, 1
        %s290 = scalar_select %p289, %s25, 1
        %s291 = smul.addr %s290, 2
        %s292 = smul.addr %s291, 4
        %s293 = scalar_lea.vmem %s0, %s292
        %v294 = vld [vmem:[%s293] sm:$0xff]
        %v296 = vcombine.high %v294, %v294
        %vm298 = vcmask 1043456
        %v299 = vsel %vm298, %v294, 0.0
        %v300 = vsel %vm298, %v296, 0.0
        %v301 = vadd.f32 %v299, %v300
        %302 = vadd.xlane.f32.xlu0 %v301
        %v303 = vpop.xlane.xlu0 %302
        %v304 = vmul.f32 %v303, 0.00390625
        %v305 = vld [vmem:[%s1] sm:$0xf]
        %v306 = vmul.f32 %v305, %v304
        %vm307 = vcmask 3072
        %v308 = vsel %vm307, %v306, 0.0
        %v309 = vrot.slane %v308, 4
        %v310 = vadd.f32 %v308, %v309
        %v311 = vrot.slane %v310, 2
        %v312 = vadd.f32 %v310, %v311
        %v313 = vrot.slane %v312, 1
        %v314 = vadd.f32 %v312, %v313
        %v315 = vld [vmem:[#allocation2] sm:$0x1]
        %v316 = vadd.f32 %v314, %v315
        %v317 = vmax.f32 %v316, 0.0
        %v318 = vld [vmem:[%s3] sm:$0xf]
        %v319 = vlaneseq
        %v320 = vshrl.u32 %v319, 7
        %v321 = vsub.s32 0, %v320
        %v322 = vrot.slane %v317, %v321
        %v323 = vmul.f32 %v318, %v322
        %v324 = vadd.f32 %v323, 0.0
        %v325 = vld [vmem:[%s4] sm:$0xf]
        %v326 = vadd.f32 %v324, %v325
        %v327 = vxor.u32 %v326, 2147483648
        %v328 = vmul.f32 %v327, 1.442695
        %v329 = vpow.pop %v328
        %v330 = vadd.f32 %v329, 1.0
        %v331 = vrcp.pop %v330
        %v332 = vmul.f32 1.0, %v331
        %334 = vset.pattern.permute.xlu0 0
        %335 = vperm.xlu0 %334, %v332
        %v336 = vpop.permute.xlu0 %335
        %v338 = vunpack.c.l.s4 839922192
        %v339 = vunpack.c.0.s8 %v338
        %v340 = vlaneseq
        %v341 = vshrl.u32 %v340, 7
        %v342 = vsub.s32 %v339, %v341
        %v343 = vrot.slane %v336, %v342
        %v345 = vmul.f32 %v294, %v343
        %v347 = vcombine.high %v345, %v345
        %v349 = vsel %vm298, %v345, -inf
        %v350 = vrot.slane %v349, 4
        %v351 = vmax.f32 %v349, %v350
        %v352 = vrot.slane %v351, 2
        %v353 = vmax.f32 %v351, %v352
        %v354 = vrot.slane %v353, 1
        %v355 = vmax.f32 %v353, %v354
        %v356 = vsel %vm298, %v347, -inf
        %v357 = vrot.slane %v356, 4
        %v358 = vmax.f32 %v356, %v357
        %v359 = vrot.slane %v358, 2
        %v360 = vmax.f32 %v358, %v359
        %v361 = vrot.slane %v360, 1
        %v362 = vmax.f32 %v360, %v361
        %v363 = vsel %vm298, %v345, 0.0
        %v364 = vrot.slane %v363, 4
        %v365 = vadd.f32 %v363, %v364
        %v366 = vrot.slane %v365, 2
        %v367 = vadd.f32 %v365, %v366
        %v368 = vrot.slane %v367, 1
        %v369 = vadd.f32 %v367, %v368
        %v370 = vsel %vm298, %v347, 0.0
        %v371 = vrot.slane %v370, 4
        %v372 = vadd.f32 %v370, %v371
        %v373 = vrot.slane %v372, 2
        %v374 = vadd.f32 %v372, %v373
        %v375 = vrot.slane %v374, 1
        %v376 = vadd.f32 %v374, %v375
        %v377 = vmul.f32 %v369, 0.25
        %v378 = vmul.f32 %v376, 0.25
        %v379 = vlaneseq
        %v380 = vand.u32 %v379, 127
        %v381 = vadd.s32 %v380, 128
        %v382 = vshra.s32 %v380, 4
        %v383 = vshra.s32 %v381, 4
        %v384 = vand.u32 %v380, 15
        %v385 = vand.u32 %v381, 15
        %386 = vrot.lane.b32.xlu0 %v355, 3
        %v387 = vpop.permute.xlu0 %386
        %388 = vrot.lane.b32.xlu0 %v362, 3
        %v389 = vpop.permute.xlu0 %388
        %vm390 = vcmp.lt.s32.totalorder %v380, 3
        %v391 = vsel %vm390, %v387, %v389
        %v392 = vsel %vm390, %v389, %v387
        %393 = vrot.lane.b32.xlu0 %v377, 3
        %v394 = vpop.permute.xlu0 %393
        %395 = vrot.lane.b32.xlu0 %v378, 3
        %v396 = vpop.permute.xlu0 %395
        %v397 = vsel %vm390, %v394, %v396
        %v398 = vsel %vm390, %v396, %v394
        %vm399 = vcmp.ge.s32.totalorder %v384, 3
        %vm400 = vcmp.ge.s32.totalorder %v385, 3
        %v401 = vsel %vm399, %v392, 0.0
        %v402 = vsel %vm400, %v391, 0.0
        %v403 = vsel %vm399, %v398, 0.0
        %v404 = vsel %vm400, %v397, 0.0
        %405 = vrot.lane.b32.xlu0 %v355, 2
        %v406 = vpop.permute.xlu0 %405
        %407 = vrot.lane.b32.xlu0 %v362, 2
        %v408 = vpop.permute.xlu0 %407
        %vm409 = vcmp.lt.s32.totalorder %v380, 2
        %v410 = vsel %vm409, %v406, %v408
        %v411 = vsel %vm409, %v408, %v406
        %412 = vrot.lane.b32.xlu0 %v377, 2
        %v413 = vpop.permute.xlu0 %412
        %414 = vrot.lane.b32.xlu0 %v378, 2
        %v415 = vpop.permute.xlu0 %414
        %v416 = vsel %vm409, %v413, %v415
        %v417 = vsel %vm409, %v415, %v413
        %vm418 = vcmp.ge.s32.totalorder %v384, 2
        %vm419 = vcmp.ge.s32.totalorder %v385, 2
        %v420 = vsel %vm418, %v411, 0.0
        %v421 = vsel %vm419, %v410, 0.0
        %v422 = vsel %vm418, %v417, 0.0
        %v423 = vsel %vm419, %v416, 0.0
        %424 = vrot.lane.b32.xlu0 %v355, 1
        %v425 = vpop.permute.xlu0 %424
        %426 = vrot.lane.b32.xlu0 %v362, 1
        %v427 = vpop.permute.xlu0 %426
        %vm428 = vcmp.lt.s32.totalorder %v380, 1
        %v429 = vsel %vm428, %v425, %v427
        %v430 = vsel %vm428, %v427, %v425
        %431 = vrot.lane.b32.xlu0 %v377, 1
        %v432 = vpop.permute.xlu0 %431
        %433 = vrot.lane.b32.xlu0 %v378, 1
        %v434 = vpop.permute.xlu0 %433
        %v435 = vsel %vm428, %v432, %v434
        %v436 = vsel %vm428, %v434, %v432
        %vm437 = vcmp.ge.s32.totalorder %v384, 1
        %vm438 = vcmp.ge.s32.totalorder %v385, 1
        %v439 = vsel %vm437, %v430, 0.0
        %v440 = vsel %vm438, %v429, 0.0
        %v441 = vsel %vm437, %v436, 0.0
        %v442 = vsel %vm438, %v435, 0.0
        %443 = vrot.lane.b32.xlu0 %v355, 127
        %v444 = vpop.permute.xlu0 %443
        %445 = vrot.lane.b32.xlu0 %v362, 127
        %v446 = vpop.permute.xlu0 %445
        %vm447 = vcmp.lt.s32.totalorder %v380, 127
        %v448 = vsel %vm447, %v444, %v446
        %v449 = vsel %vm447, %v446, %v444
        %450 = vrot.lane.b32.xlu0 %v377, 127
        %v451 = vpop.permute.xlu0 %450
        %452 = vrot.lane.b32.xlu0 %v378, 127
        %v453 = vpop.permute.xlu0 %452
        %v454 = vsel %vm447, %v451, %v453
        %v455 = vsel %vm447, %v453, %v451
        %vm456 = vcmp.lt.s32.totalorder %v384, 15
        %vm457 = vcmp.lt.s32.totalorder %v385, 15
        %v458 = vsel %vm456, %v448, 0.0
        %v459 = vsel %vm457, %v449, 0.0
        %v460 = vsel %vm456, %v454, 0.0
        %v461 = vsel %vm457, %v455, 0.0
        %462 = vrot.lane.b32.xlu0 %v355, 126
        %v463 = vpop.permute.xlu0 %462
        %464 = vrot.lane.b32.xlu0 %v362, 126
        %v465 = vpop.permute.xlu0 %464
        %vm466 = vcmp.lt.s32.totalorder %v380, 126
        %v467 = vsel %vm466, %v463, %v465
        %v468 = vsel %vm466, %v465, %v463
        %469 = vrot.lane.b32.xlu0 %v377, 126
        %v470 = vpop.permute.xlu0 %469
        %471 = vrot.lane.b32.xlu0 %v378, 126
        %v472 = vpop.permute.xlu0 %471
        %v473 = vsel %vm466, %v470, %v472
        %v474 = vsel %vm466, %v472, %v470
        %vm475 = vcmp.lt.s32.totalorder %v384, 14
        %vm476 = vcmp.lt.s32.totalorder %v385, 14
        %v477 = vsel %vm475, %v467, 0.0
        %v478 = vsel %vm476, %v468, 0.0
        %v479 = vsel %vm475, %v473, 0.0
        %v480 = vsel %vm476, %v474, 0.0
        %481 = vrot.lane.b32.xlu0 %v355, 125
        %v482 = vpop.permute.xlu0 %481
        %483 = vrot.lane.b32.xlu0 %v362, 125
        %v484 = vpop.permute.xlu0 %483
        %vm485 = vcmp.lt.s32.totalorder %v380, 125
        %v486 = vsel %vm485, %v482, %v484
        %v487 = vsel %vm485, %v484, %v482
        %488 = vrot.lane.b32.xlu0 %v377, 125
        %v489 = vpop.permute.xlu0 %488
        %490 = vrot.lane.b32.xlu0 %v378, 125
        %v491 = vpop.permute.xlu0 %490
        %v492 = vsel %vm485, %v489, %v491
        %v493 = vsel %vm485, %v491, %v489
        %vm494 = vcmp.lt.s32.totalorder %v384, 13
        %vm495 = vcmp.lt.s32.totalorder %v385, 13
        %v496 = vsel %vm494, %v486, 0.0
        %v497 = vsel %vm495, %v487, 0.0
        %v498 = vsel %vm494, %v492, 0.0
        %v499 = vsel %vm495, %v493, 0.0
        %s500 = sld [smem:[#allocation3]]
        %v501 = vstv %s500
        %s502 = sld [smem:[#allocation4]]
        %v503 = vstv %s502
        %v504 = vmul.f32 %v401, %v503
        %v505 = vmul.f32 %v402, %v503
        %s506 = sld [smem:[#allocation4 + $0x31]]
        %v507 = vstv %s506
        %v508 = vmul.f32 %v403, %v507
        %v509 = vmul.f32 %v404, %v507
        %v510 = vadd.f32 %v504, %v508
        %v511 = vadd.f32 %v505, %v509
        %s512 = sld [smem:[#allocation4 + $0x1]]
        %v513 = vstv %s512
        %v514 = vmul.f32 %v420, %v513
        %v515 = vmul.f32 %v421, %v513
        %s516 = sld [smem:[#allocation4 + $0x32]]
        %v517 = vstv %s516
        %v518 = vmul.f32 %v422, %v517
        %v519 = vmul.f32 %v423, %v517
        %v520 = vadd.f32 %v514, %v518
        %v521 = vadd.f32 %v515, %v519
        %v522 = vadd.f32 %v510, %v520
        %v523 = vadd.f32 %v511, %v521
        %s524 = sld [smem:[#allocation4 + $0x2]]
        %v525 = vstv %s524
        %v526 = vmul.f32 %v439, %v525
        %v527 = vmul.f32 %v440, %v525
        %s528 = sld [smem:[#allocation4 + $0x33]]
        %v529 = vstv %s528
        %v530 = vmul.f32 %v441, %v529
        %v531 = vmul.f32 %v442, %v529
        %v532 = vadd.f32 %v526, %v530
        %v533 = vadd.f32 %v527, %v531
        %v534 = vadd.f32 %v522, %v532
        %v535 = vadd.f32 %v523, %v533
        %s536 = sld [smem:[#allocation4 + $0x3]]
        %v537 = vstv %s536
        %v538 = vmul.f32 %v355, %v537
        %v539 = vmul.f32 %v362, %v537
        %s540 = sld [smem:[#allocation4 + $0x34]]
        %v541 = vstv %s540
        %v542 = vmul.f32 %v377, %v541
        %v543 = vmul.f32 %v378, %v541
        %v544 = vadd.f32 %v538, %v542
        %v545 = vadd.f32 %v539, %v543
        %v546 = vadd.f32 %v534, %v544
        %v547 = vadd.f32 %v535, %v545
        %s548 = sld [smem:[#allocation4 + $0x4]]
        %v549 = vstv %s548
        %v550 = vmul.f32 %v458, %v549
        %v551 = vmul.f32 %v459, %v549
        %s552 = sld [smem:[#allocation4 + $0x35]]
        %v553 = vstv %s552
        %v554 = vmul.f32 %v460, %v553
        %v555 = vmul.f32 %v461, %v553
        %v556 = vadd.f32 %v550, %v554
        %v557 = vadd.f32 %v551, %v555
        %v558 = vadd.f32 %v546, %v556
        %v559 = vadd.f32 %v547, %v557
        %s560 = sld [smem:[#allocation4 + $0x5]]
        %v561 = vstv %s560
        %v562 = vmul.f32 %v477, %v561
        %v563 = vmul.f32 %v478, %v561
        %s564 = sld [smem:[#allocation4 + $0x36]]
        %v565 = vstv %s564
        %v566 = vmul.f32 %v479, %v565
        %v567 = vmul.f32 %v480, %v565
        %v568 = vadd.f32 %v562, %v566
        %v569 = vadd.f32 %v563, %v567
        %v570 = vadd.f32 %v558, %v568
        %v571 = vadd.f32 %v559, %v569
        %s572 = sld [smem:[#allocation4 + $0x6]]
        %v573 = vstv %s572
        %v574 = vmul.f32 %v496, %v573
        %v575 = vmul.f32 %v497, %v573
        %s576 = sld [smem:[#allocation4 + $0x37]]
        %v577 = vstv %s576
        %v578 = vmul.f32 %v498, %v577
        %v579 = vmul.f32 %v499, %v577
        %v580 = vadd.f32 %v574, %v578
        %v581 = vadd.f32 %v575, %v579
        %v582 = vadd.f32 %v570, %v580
        %v583 = vadd.f32 %v571, %v581
        %584 = vrot.lane.b32.xlu0 %v582, 48
        %v585 = vpop.permute.xlu0 %584
        %586 = vrot.lane.b32.xlu0 %v583, 48
        %v587 = vpop.permute.xlu0 %586
        %vm588 = vcmp.lt.s32.totalorder %v380, 48
        %v589 = vsel %vm588, %v585, %v587
        %v590 = vsel %vm588, %v587, %v585
        %vm591 = vcmp.ge.s32.totalorder %v382, 3
        %vm592 = vcmp.ge.s32.totalorder %v383, 3
        %v593 = vsel %vm591, %v590, 0.0
        %v594 = vsel %vm592, %v589, 0.0
        %v595 = vadd.f32 %v501, %v593
        %v596 = vadd.f32 %v501, %v594
        %s597 = sld [smem:[#allocation4 + $0x7]]
        %v598 = vstv %s597
        %v599 = vmul.f32 %v401, %v598
        %v600 = vmul.f32 %v402, %v598
        %s601 = sld [smem:[#allocation4 + $0x38]]
        %v602 = vstv %s601
        %v603 = vmul.f32 %v403, %v602
        %v604 = vmul.f32 %v404, %v602
        %v605 = vadd.f32 %v599, %v603
        %v606 = vadd.f32 %v600, %v604
        %s607 = sld [smem:[#allocation4 + $0x8]]
        %v608 = vstv %s607
        %v609 = vmul.f32 %v420, %v608
        %v610 = vmul.f32 %v421, %v608
        %s611 = sld [smem:[#allocation4 + $0x39]]
        %v612 = vstv %s611
        %v613 = vmul.f32 %v422, %v612
        %v614 = vmul.f32 %v423, %v612
        %v615 = vadd.f32 %v609, %v613
        %v616 = vadd.f32 %v610, %v614
        %v617 = vadd.f32 %v605, %v615
        %v618 = vadd.f32 %v606, %v616
        %s619 = sld [smem:[#allocation4 + $0x9]]
        %v620 = vstv %s619
        %v621 = vmul.f32 %v439, %v620
        %v622 = vmul.f32 %v440, %v620
        %s623 = sld [smem:[#allocation4 + $0x3a]]
        %v624 = vstv %s623
        %v625 = vmul.f32 %v441, %v624
        %v626 = vmul.f32 %v442, %v624
        %v627 = vadd.f32 %v621, %v625
        %v628 = vadd.f32 %v622, %v626
        %v629 = vadd.f32 %v617, %v627
        %v630 = vadd.f32 %v618, %v628
        %s631 = sld [smem:[#allocation4 + $0xa]]
        %v632 = vstv %s631
        %v633 = vmul.f32 %v355, %v632
        %v634 = vmul.f32 %v362, %v632
        %s635 = sld [smem:[#allocation4 + $0x3b]]
        %v636 = vstv %s635
        %v637 = vmul.f32 %v377, %v636
        %v638 = vmul.f32 %v378, %v636
        %v639 = vadd.f32 %v633, %v637
        %v640 = vadd.f32 %v634, %v638
        %v641 = vadd.f32 %v629, %v639
        %v642 = vadd.f32 %v630, %v640
        %s643 = sld [smem:[#allocation4 + $0xb]]
        %v644 = vstv %s643
        %v645 = vmul.f32 %v458, %v644
        %v646 = vmul.f32 %v459, %v644
        %s647 = sld [smem:[#allocation4 + $0x3c]]
        %v648 = vstv %s647
        %v649 = vmul.f32 %v460, %v648
        %v650 = vmul.f32 %v461, %v648
        %v651 = vadd.f32 %v645, %v649
        %v652 = vadd.f32 %v646, %v650
        %v653 = vadd.f32 %v641, %v651
        %v654 = vadd.f32 %v642, %v652
        %s655 = sld [smem:[#allocation4 + $0xc]]
        %v656 = vstv %s655
        %v657 = vmul.f32 %v477, %v656
        %v658 = vmul.f32 %v478, %v656
        %s659 = sld [smem:[#allocation4 + $0x3d]]
        %v660 = vstv %s659
        %v661 = vmul.f32 %v479, %v660
        %v662 = vmul.f32 %v480, %v660
        %v663 = vadd.f32 %v657, %v661
        %v664 = vadd.f32 %v658, %v662
        %v665 = vadd.f32 %v653, %v663
        %v666 = vadd.f32 %v654, %v664
        %s667 = sld [smem:[#allocation4 + $0xd]]
        %v668 = vstv %s667
        %v669 = vmul.f32 %v496, %v668
        %v670 = vmul.f32 %v497, %v668
        %s671 = sld [smem:[#allocation4 + $0x3e]]
        %v672 = vstv %s671
        %v673 = vmul.f32 %v498, %v672
        %v674 = vmul.f32 %v499, %v672
        %v675 = vadd.f32 %v669, %v673
        %v676 = vadd.f32 %v670, %v674
        %v677 = vadd.f32 %v665, %v675
        %v678 = vadd.f32 %v666, %v676
        %679 = vrot.lane.b32.xlu0 %v677, 32
        %v680 = vpop.permute.xlu0 %679
        %681 = vrot.lane.b32.xlu0 %v678, 32
        %v682 = vpop.permute.xlu0 %681
        %vm683 = vcmp.lt.s32.totalorder %v380, 32
        %v684 = vsel %vm683, %v680, %v682
        %v685 = vsel %vm683, %v682, %v680
        %vm686 = vcmp.ge.s32.totalorder %v382, 2
        %vm687 = vcmp.ge.s32.totalorder %v383, 2
        %v688 = vsel %vm686, %v685, 0.0
        %v689 = vsel %vm687, %v684, 0.0
        %v690 = vadd.f32 %v595, %v688
        %v691 = vadd.f32 %v596, %v689
        %s692 = sld [smem:[#allocation4 + $0xe]]
        %v693 = vstv %s692
        %v694 = vmul.f32 %v401, %v693
        %v695 = vmul.f32 %v402, %v693
        %s696 = sld [smem:[#allocation4 + $0x3f]]
        %v697 = vstv %s696
        %v698 = vmul.f32 %v403, %v697
        %v699 = vmul.f32 %v404, %v697
        %v700 = vadd.f32 %v694, %v698
        %v701 = vadd.f32 %v695, %v699
        %s702 = sld [smem:[#allocation4 + $0xf]]
        %v703 = vstv %s702
        %v704 = vmul.f32 %v420, %v703
        %v705 = vmul.f32 %v421, %v703
        %s706 = sld [smem:[#allocation4 + $0x40]]
        %v707 = vstv %s706
        %v708 = vmul.f32 %v422, %v707
        %v709 = vmul.f32 %v423, %v707
        %v710 = vadd.f32 %v704, %v708
        %v711 = vadd.f32 %v705, %v709
        %v712 = vadd.f32 %v700, %v710
        %v713 = vadd.f32 %v701, %v711
        %s714 = sld [smem:[#allocation4 + $0x10]]
        %v715 = vstv %s714
        %v716 = vmul.f32 %v439, %v715
        %v717 = vmul.f32 %v440, %v715
        %s718 = sld [smem:[#allocation4 + $0x41]]
        %v719 = vstv %s718
        %v720 = vmul.f32 %v441, %v719
        %v721 = vmul.f32 %v442, %v719
        %v722 = vadd.f32 %v716, %v720
        %v723 = vadd.f32 %v717, %v721
        %v724 = vadd.f32 %v712, %v722
        %v725 = vadd.f32 %v713, %v723
        %s726 = sld [smem:[#allocation4 + $0x11]]
        %v727 = vstv %s726
        %v728 = vmul.f32 %v355, %v727
        %v729 = vmul.f32 %v362, %v727
        %s730 = sld [smem:[#allocation4 + $0x42]]
        %v731 = vstv %s730
        %v732 = vmul.f32 %v377, %v731
        %v733 = vmul.f32 %v378, %v731
        %v734 = vadd.f32 %v728, %v732
        %v735 = vadd.f32 %v729, %v733
        %v736 = vadd.f32 %v724, %v734
        %v737 = vadd.f32 %v725, %v735
        %s738 = sld [smem:[#allocation4 + $0x12]]
        %v739 = vstv %s738
        %v740 = vmul.f32 %v458, %v739
        %v741 = vmul.f32 %v459, %v739
        %s742 = sld [smem:[#allocation4 + $0x43]]
        %v743 = vstv %s742
        %v744 = vmul.f32 %v460, %v743
        %v745 = vmul.f32 %v461, %v743
        %v746 = vadd.f32 %v740, %v744
        %v747 = vadd.f32 %v741, %v745
        %v748 = vadd.f32 %v736, %v746
        %v749 = vadd.f32 %v737, %v747
        %s750 = sld [smem:[#allocation4 + $0x13]]
        %v751 = vstv %s750
        %v752 = vmul.f32 %v477, %v751
        %v753 = vmul.f32 %v478, %v751
        %s754 = sld [smem:[#allocation4 + $0x44]]
        %v755 = vstv %s754
        %v756 = vmul.f32 %v479, %v755
        %v757 = vmul.f32 %v480, %v755
        %v758 = vadd.f32 %v752, %v756
        %v759 = vadd.f32 %v753, %v757
        %v760 = vadd.f32 %v748, %v758
        %v761 = vadd.f32 %v749, %v759
        %s762 = sld [smem:[#allocation4 + $0x14]]
        %v763 = vstv %s762
        %v764 = vmul.f32 %v496, %v763
        %v765 = vmul.f32 %v497, %v763
        %s766 = sld [smem:[#allocation4 + $0x45]]
        %v767 = vstv %s766
        %v768 = vmul.f32 %v498, %v767
        %v769 = vmul.f32 %v499, %v767
        %v770 = vadd.f32 %v764, %v768
        %v771 = vadd.f32 %v765, %v769
        %v772 = vadd.f32 %v760, %v770
        %v773 = vadd.f32 %v761, %v771
        %774 = vrot.lane.b32.xlu0 %v772, 16
        %v775 = vpop.permute.xlu0 %774
        %776 = vrot.lane.b32.xlu0 %v773, 16
        %v777 = vpop.permute.xlu0 %776
        %vm778 = vcmp.lt.s32.totalorder %v380, 16
        %v779 = vsel %vm778, %v775, %v777
        %v780 = vsel %vm778, %v777, %v775
        %vm781 = vcmp.ge.s32.totalorder %v382, 1
        %vm782 = vcmp.ge.s32.totalorder %v383, 1
        %v783 = vsel %vm781, %v780, 0.0
        %v784 = vsel %vm782, %v779, 0.0
        %v785 = vadd.f32 %v690, %v783
        %v786 = vadd.f32 %v691, %v784
        %s787 = sld [smem:[#allocation4 + $0x15]]
        %v788 = vstv %s787
        %v789 = vmul.f32 %v401, %v788
        %v790 = vmul.f32 %v402, %v788
        %s791 = sld [smem:[#allocation4 + $0x46]]
        %v792 = vstv %s791
        %v793 = vmul.f32 %v403, %v792
        %v794 = vmul.f32 %v404, %v792
        %v795 = vadd.f32 %v789, %v793
        %v796 = vadd.f32 %v790, %v794
        %s797 = sld [smem:[#allocation4 + $0x16]]
        %v798 = vstv %s797
        %v799 = vmul.f32 %v420, %v798
        %v800 = vmul.f32 %v421, %v798
        %s801 = sld [smem:[#allocation4 + $0x47]]
        %v802 = vstv %s801
        %v803 = vmul.f32 %v422, %v802
        %v804 = vmul.f32 %v423, %v802
        %v805 = vadd.f32 %v799, %v803
        %v806 = vadd.f32 %v800, %v804
        %v807 = vadd.f32 %v795, %v805
        %v808 = vadd.f32 %v796, %v806
        %s809 = sld [smem:[#allocation4 + $0x17]]
        %v810 = vstv %s809
        %v811 = vmul.f32 %v439, %v810
        %v812 = vmul.f32 %v440, %v810
        %s813 = sld [smem:[#allocation4 + $0x48]]
        %v814 = vstv %s813
        %v815 = vmul.f32 %v441, %v814
        %v816 = vmul.f32 %v442, %v814
        %v817 = vadd.f32 %v811, %v815
        %v818 = vadd.f32 %v812, %v816
        %v819 = vadd.f32 %v807, %v817
        %v820 = vadd.f32 %v808, %v818
        %s821 = sld [smem:[#allocation4 + $0x18]]
        %v822 = vstv %s821
        %v823 = vmul.f32 %v355, %v822
        %v824 = vmul.f32 %v362, %v822
        %s825 = sld [smem:[#allocation4 + $0x49]]
        %v826 = vstv %s825
        %v827 = vmul.f32 %v377, %v826
        %v828 = vmul.f32 %v378, %v826
        %v829 = vadd.f32 %v823, %v827
        %v830 = vadd.f32 %v824, %v828
        %v831 = vadd.f32 %v819, %v829
        %v832 = vadd.f32 %v820, %v830
        %s833 = sld [smem:[#allocation4 + $0x19]]
        %v834 = vstv %s833
        %v835 = vmul.f32 %v458, %v834
        %v836 = vmul.f32 %v459, %v834
        %s837 = sld [smem:[#allocation4 + $0x4a]]
        %v838 = vstv %s837
        %v839 = vmul.f32 %v460, %v838
        %v840 = vmul.f32 %v461, %v838
        %v841 = vadd.f32 %v835, %v839
        %v842 = vadd.f32 %v836, %v840
        %v843 = vadd.f32 %v831, %v841
        %v844 = vadd.f32 %v832, %v842
        %s845 = sld [smem:[#allocation4 + $0x1a]]
        %v846 = vstv %s845
        %v847 = vmul.f32 %v477, %v846
        %v848 = vmul.f32 %v478, %v846
        %s849 = sld [smem:[#allocation4 + $0x4b]]
        %v850 = vstv %s849
        %v851 = vmul.f32 %v479, %v850
        %v852 = vmul.f32 %v480, %v850
        %v853 = vadd.f32 %v847, %v851
        %v854 = vadd.f32 %v848, %v852
        %v855 = vadd.f32 %v843, %v853
        %v856 = vadd.f32 %v844, %v854
        %s857 = sld [smem:[#allocation4 + $0x1b]]
        %v858 = vstv %s857
        %v859 = vmul.f32 %v496, %v858
        %v860 = vmul.f32 %v497, %v858
        %s861 = sld [smem:[#allocation4 + $0x4c]]
        %v862 = vstv %s861
        %v863 = vmul.f32 %v498, %v862
        %v864 = vmul.f32 %v499, %v862
        %v865 = vadd.f32 %v859, %v863
        %v866 = vadd.f32 %v860, %v864
        %v867 = vadd.f32 %v855, %v865
        %v868 = vadd.f32 %v856, %v866
        %v869 = vadd.f32 %v785, %v867
        %v870 = vadd.f32 %v786, %v868
        %s871 = sld [smem:[#allocation4 + $0x1c]]
        %v872 = vstv %s871
        %v873 = vmul.f32 %v401, %v872
        %v874 = vmul.f32 %v402, %v872
        %s875 = sld [smem:[#allocation4 + $0x4d]]
        %v876 = vstv %s875
        %v877 = vmul.f32 %v403, %v876
        %v878 = vmul.f32 %v404, %v876
        %v879 = vadd.f32 %v873, %v877
        %v880 = vadd.f32 %v874, %v878
        %s881 = sld [smem:[#allocation4 + $0x1d]]
        %v882 = vstv %s881
        %v883 = vmul.f32 %v420, %v882
        %v884 = vmul.f32 %v421, %v882
        %s885 = sld [smem:[#allocation4 + $0x4e]]
        %v886 = vstv %s885
        %v887 = vmul.f32 %v422, %v886
        %v888 = vmul.f32 %v423, %v886
        %v889 = vadd.f32 %v883, %v887
        %v890 = vadd.f32 %v884, %v888
        %v891 = vadd.f32 %v879, %v889
        %v892 = vadd.f32 %v880, %v890
        %s893 = sld [smem:[#allocation4 + $0x1e]]
        %v894 = vstv %s893
        %v895 = vmul.f32 %v439, %v894
        %v896 = vmul.f32 %v440, %v894
        %s897 = sld [smem:[#allocation4 + $0x4f]]
        %v898 = vstv %s897
        %v899 = vmul.f32 %v441, %v898
        %v900 = vmul.f32 %v442, %v898
        %v901 = vadd.f32 %v895, %v899
        %v902 = vadd.f32 %v896, %v900
        %v903 = vadd.f32 %v891, %v901
        %v904 = vadd.f32 %v892, %v902
        %s905 = sld [smem:[#allocation4 + $0x1f]]
        %v906 = vstv %s905
        %v907 = vmul.f32 %v355, %v906
        %v908 = vmul.f32 %v362, %v906
        %s909 = sld [smem:[#allocation4 + $0x50]]
        %v910 = vstv %s909
        %v911 = vmul.f32 %v377, %v910
        %v912 = vmul.f32 %v378, %v910
        %v913 = vadd.f32 %v907, %v911
        %v914 = vadd.f32 %v908, %v912
        %v915 = vadd.f32 %v903, %v913
        %v916 = vadd.f32 %v904, %v914
        %s917 = sld [smem:[#allocation4 + $0x20]]
        %v918 = vstv %s917
        %v919 = vmul.f32 %v458, %v918
        %v920 = vmul.f32 %v459, %v918
        %s921 = sld [smem:[#allocation4 + $0x51]]
        %v922 = vstv %s921
        %v923 = vmul.f32 %v460, %v922
        %v924 = vmul.f32 %v461, %v922
        %v925 = vadd.f32 %v919, %v923
        %v926 = vadd.f32 %v920, %v924
        %v927 = vadd.f32 %v915, %v925
        %v928 = vadd.f32 %v916, %v926
        %s929 = sld [smem:[#allocation4 + $0x21]]
        %v930 = vstv %s929
        %v931 = vmul.f32 %v477, %v930
        %v932 = vmul.f32 %v478, %v930
        %s933 = sld [smem:[#allocation4 + $0x52]]
        %v934 = vstv %s933
        %v935 = vmul.f32 %v479, %v934
        %v936 = vmul.f32 %v480, %v934
        %v937 = vadd.f32 %v931, %v935
        %v938 = vadd.f32 %v932, %v936
        %v939 = vadd.f32 %v927, %v937
        %v940 = vadd.f32 %v928, %v938
        %s941 = sld [smem:[#allocation4 + $0x22]]
        %v942 = vstv %s941
        %v943 = vmul.f32 %v496, %v942
        %v944 = vmul.f32 %v497, %v942
        %s945 = sld [smem:[#allocation4 + $0x53]]
        %v946 = vstv %s945
        %v947 = vmul.f32 %v498, %v946
        %v948 = vmul.f32 %v499, %v946
        %v949 = vadd.f32 %v943, %v947
        %v950 = vadd.f32 %v944, %v948
        %v951 = vadd.f32 %v939, %v949
        %v952 = vadd.f32 %v940, %v950
        %953 = vrot.lane.b32.xlu0 %v951, 112
        %v954 = vpop.permute.xlu0 %953
        %955 = vrot.lane.b32.xlu0 %v952, 112
        %v956 = vpop.permute.xlu0 %955
        %vm957 = vcmp.lt.s32.totalorder %v380, 112
        %v958 = vsel %vm957, %v954, %v956
        %v959 = vsel %vm957, %v956, %v954
        %vm960 = vcmp.lt.s32.totalorder %v382, 15
        %vm961 = vcmp.lt.s32.totalorder %v383, 15
        %v962 = vsel %vm960, %v958, 0.0
        %v963 = vsel %vm961, %v959, 0.0
        %v964 = vadd.f32 %v869, %v962
        %v965 = vadd.f32 %v870, %v963
        %s966 = sld [smem:[#allocation4 + $0x23]]
        %v967 = vstv %s966
        %v968 = vmul.f32 %v401, %v967
        %v969 = vmul.f32 %v402, %v967
        %s970 = sld [smem:[#allocation4 + $0x54]]
        %v971 = vstv %s970
        %v972 = vmul.f32 %v403, %v971
        %v973 = vmul.f32 %v404, %v971
        %v974 = vadd.f32 %v968, %v972
        %v975 = vadd.f32 %v969, %v973
        %s976 = sld [smem:[#allocation4 + $0x24]]
        %v977 = vstv %s976
        %v978 = vmul.f32 %v420, %v977
        %v979 = vmul.f32 %v421, %v977
        %s980 = sld [smem:[#allocation4 + $0x55]]
        %v981 = vstv %s980
        %v982 = vmul.f32 %v422, %v981
        %v983 = vmul.f32 %v423, %v981
        %v984 = vadd.f32 %v978, %v982
        %v985 = vadd.f32 %v979, %v983
        %v986 = vadd.f32 %v974, %v984
        %v987 = vadd.f32 %v975, %v985
        %s988 = sld [smem:[#allocation4 + $0x25]]
        %v989 = vstv %s988
        %v990 = vmul.f32 %v439, %v989
        %v991 = vmul.f32 %v440, %v989
        %s992 = sld [smem:[#allocation4 + $0x56]]
        %v993 = vstv %s992
        %v994 = vmul.f32 %v441, %v993
        %v995 = vmul.f32 %v442, %v993
        %v996 = vadd.f32 %v990, %v994
        %v997 = vadd.f32 %v991, %v995
        %v998 = vadd.f32 %v986, %v996
        %v999 = vadd.f32 %v987, %v997
        %s1000 = sld [smem:[#allocation4 + $0x26]]
        %v1001 = vstv %s1000
        %v1002 = vmul.f32 %v355, %v1001
        %v1003 = vmul.f32 %v362, %v1001
        %s1004 = sld [smem:[#allocation4 + $0x57]]
        %v1005 = vstv %s1004
        %v1006 = vmul.f32 %v377, %v1005
        %v1007 = vmul.f32 %v378, %v1005
        %v1008 = vadd.f32 %v1002, %v1006
        %v1009 = vadd.f32 %v1003, %v1007
        %v1010 = vadd.f32 %v998, %v1008
        %v1011 = vadd.f32 %v999, %v1009
        %s1012 = sld [smem:[#allocation4 + $0x27]]
        %v1013 = vstv %s1012
        %v1014 = vmul.f32 %v458, %v1013
        %v1015 = vmul.f32 %v459, %v1013
        %s1016 = sld [smem:[#allocation4 + $0x58]]
        %v1017 = vstv %s1016
        %v1018 = vmul.f32 %v460, %v1017
        %v1019 = vmul.f32 %v461, %v1017
        %v1020 = vadd.f32 %v1014, %v1018
        %v1021 = vadd.f32 %v1015, %v1019
        %v1022 = vadd.f32 %v1010, %v1020
        %v1023 = vadd.f32 %v1011, %v1021
        %s1024 = sld [smem:[#allocation4 + $0x28]]
        %v1025 = vstv %s1024
        %v1026 = vmul.f32 %v477, %v1025
        %v1027 = vmul.f32 %v478, %v1025
        %s1028 = sld [smem:[#allocation4 + $0x59]]
        %v1029 = vstv %s1028
        %v1030 = vmul.f32 %v479, %v1029
        %v1031 = vmul.f32 %v480, %v1029
        %v1032 = vadd.f32 %v1026, %v1030
        %v1033 = vadd.f32 %v1027, %v1031
        %v1034 = vadd.f32 %v1022, %v1032
        %v1035 = vadd.f32 %v1023, %v1033
        %s1036 = sld [smem:[#allocation4 + $0x29]]
        %v1037 = vstv %s1036
        %v1038 = vmul.f32 %v496, %v1037
        %v1039 = vmul.f32 %v497, %v1037
        %s1040 = sld [smem:[#allocation4 + $0x5a]]
        %v1041 = vstv %s1040
        %v1042 = vmul.f32 %v498, %v1041
        %v1043 = vmul.f32 %v499, %v1041
        %v1044 = vadd.f32 %v1038, %v1042
        %v1045 = vadd.f32 %v1039, %v1043
        %v1046 = vadd.f32 %v1034, %v1044
        %v1047 = vadd.f32 %v1035, %v1045
        %1048 = vrot.lane.b32.xlu0 %v1046, 96
        %v1049 = vpop.permute.xlu0 %1048
        %1050 = vrot.lane.b32.xlu0 %v1047, 96
        %v1051 = vpop.permute.xlu0 %1050
        %vm1052 = vcmp.lt.s32.totalorder %v380, 96
        %v1053 = vsel %vm1052, %v1049, %v1051
        %v1054 = vsel %vm1052, %v1051, %v1049
        %vm1055 = vcmp.lt.s32.totalorder %v382, 14
        %vm1056 = vcmp.lt.s32.totalorder %v383, 14
        %v1057 = vsel %vm1055, %v1053, 0.0
        %v1058 = vsel %vm1056, %v1054, 0.0
        %v1059 = vadd.f32 %v964, %v1057
        %v1060 = vadd.f32 %v965, %v1058
        %s1061 = sld [smem:[#allocation4 + $0x2a]]
        %v1062 = vstv %s1061
        %v1063 = vmul.f32 %v401, %v1062
        %v1064 = vmul.f32 %v402, %v1062
        %s1065 = sld [smem:[#allocation4 + $0x5b]]
        %v1066 = vstv %s1065
        %v1067 = vmul.f32 %v403, %v1066
        %v1068 = vmul.f32 %v404, %v1066
        %v1069 = vadd.f32 %v1063, %v1067
        %v1070 = vadd.f32 %v1064, %v1068
        %s1071 = sld [smem:[#allocation4 + $0x2b]]
        %v1072 = vstv %s1071
        %v1073 = vmul.f32 %v420, %v1072
        %v1074 = vmul.f32 %v421, %v1072
        %s1075 = sld [smem:[#allocation4 + $0x5c]]
        %v1076 = vstv %s1075
        %v1077 = vmul.f32 %v422, %v1076
        %v1078 = vmul.f32 %v423, %v1076
        %v1079 = vadd.f32 %v1073, %v1077
        %v1080 = vadd.f32 %v1074, %v1078
        %v1081 = vadd.f32 %v1069, %v1079
        %v1082 = vadd.f32 %v1070, %v1080
        %s1083 = sld [smem:[#allocation4 + $0x2c]]
        %v1084 = vstv %s1083
        %v1085 = vmul.f32 %v439, %v1084
        %v1086 = vmul.f32 %v440, %v1084
        %s1087 = sld [smem:[#allocation4 + $0x5d]]
        %v1088 = vstv %s1087
        %v1089 = vmul.f32 %v441, %v1088
        %v1090 = vmul.f32 %v442, %v1088
        %v1091 = vadd.f32 %v1085, %v1089
        %v1092 = vadd.f32 %v1086, %v1090
        %v1093 = vadd.f32 %v1081, %v1091
        %v1094 = vadd.f32 %v1082, %v1092
        %s1095 = sld [smem:[#allocation4 + $0x2d]]
        %v1096 = vstv %s1095
        %v1097 = vmul.f32 %v355, %v1096
        %v1098 = vmul.f32 %v362, %v1096
        %s1099 = sld [smem:[#allocation4 + $0x5e]]
        %v1100 = vstv %s1099
        %v1101 = vmul.f32 %v377, %v1100
        %v1102 = vmul.f32 %v378, %v1100
        %v1103 = vadd.f32 %v1097, %v1101
        %v1104 = vadd.f32 %v1098, %v1102
        %v1105 = vadd.f32 %v1093, %v1103
        %v1106 = vadd.f32 %v1094, %v1104
        %s1107 = sld [smem:[#allocation4 + $0x2e]]
        %v1108 = vstv %s1107
        %v1109 = vmul.f32 %v458, %v1108
        %v1110 = vmul.f32 %v459, %v1108
        %s1111 = sld [smem:[#allocation4 + $0x5f]]
        %v1112 = vstv %s1111
        %v1113 = vmul.f32 %v460, %v1112
        %v1114 = vmul.f32 %v461, %v1112
        %v1115 = vadd.f32 %v1109, %v1113
        %v1116 = vadd.f32 %v1110, %v1114
        %v1117 = vadd.f32 %v1105, %v1115
        %v1118 = vadd.f32 %v1106, %v1116
        %s1119 = sld [smem:[#allocation4 + $0x2f]]
        %v1120 = vstv %s1119
        %v1121 = vmul.f32 %v477, %v1120
        %v1122 = vmul.f32 %v478, %v1120
        %s1123 = sld [smem:[#allocation4 + $0x60]]
        %v1124 = vstv %s1123
        %v1125 = vmul.f32 %v479, %v1124
        %v1126 = vmul.f32 %v480, %v1124
        %v1127 = vadd.f32 %v1121, %v1125
        %v1128 = vadd.f32 %v1122, %v1126
        %v1129 = vadd.f32 %v1117, %v1127
        %v1130 = vadd.f32 %v1118, %v1128
        %s1131 = sld [smem:[#allocation4 + $0x30]]
        %v1132 = vstv %s1131
        %v1133 = vmul.f32 %v496, %v1132
        %v1134 = vmul.f32 %v497, %v1132
        %s1135 = sld [smem:[#allocation4 + $0x61]]
        %v1136 = vstv %s1135
        %v1137 = vmul.f32 %v498, %v1136
        %v1138 = vmul.f32 %v499, %v1136
        %v1139 = vadd.f32 %v1133, %v1137
        %v1140 = vadd.f32 %v1134, %v1138
        %v1141 = vadd.f32 %v1129, %v1139
        %v1142 = vadd.f32 %v1130, %v1140
        %1143 = vrot.lane.b32.xlu0 %v1141, 80
        %v1144 = vpop.permute.xlu0 %1143
        %1145 = vrot.lane.b32.xlu0 %v1142, 80
        %v1146 = vpop.permute.xlu0 %1145
        %vm1147 = vcmp.lt.s32.totalorder %v380, 80
        %v1148 = vsel %vm1147, %v1144, %v1146
        %v1149 = vsel %vm1147, %v1146, %v1144
        %vm1150 = vcmp.lt.s32.totalorder %v382, 13
        %vm1151 = vcmp.lt.s32.totalorder %v383, 13
        %v1152 = vsel %vm1150, %v1148, 0.0
        %v1153 = vsel %vm1151, %v1149, 0.0
        %v1154 = vadd.f32 %v1059, %v1152
        %v1155 = vadd.f32 %v1060, %v1153
        %v1156 = vxor.u32 %v1154, 2147483648
        %v1157 = vxor.u32 %v1155, 2147483648
        %v1158 = vmul.f32 %v1156, 1.442695
        %v1159 = vpow.pop %v1158
        %v1160 = vmul.f32 %v1157, 1.442695
        %v1161 = vpow.pop %v1160
        %v1162 = vadd.f32 %v1159, 1.0
        %v1163 = vadd.f32 %v1161, 1.0
        %v1164 = vrcp.pop %v1162
        %v1165 = vmul.f32 1.0, %v1164
        %v1166 = vrcp.pop %v1163
        %v1167 = vmul.f32 1.0, %v1166
        %v1168 = vlaneseq
        %v1169 = vshrl.u32 %v1168, 7
        %v1170 = vsub.s32 0, %v1169
        %v1171 = vrot.slane %v1165, %v1170
        %v1172 = vlaneseq
        %v1173 = vshrl.u32 %v1172, 7
        %v1174 = vsub.s32 0, %v1173
        %v1175 = vrot.slane %v1167, %v1174
        %v1178 = vcombine.low %v1171, %v1175
        %v1180 = vmul.f32 %v345, %v1178
        %1181 = vst [vmem:[%s288] sm:$0xff] %v1180
        %s1182 = sand.u32 %s185, 1
        %s1183 = scalar_lea.sflag [#allocation5], %s1182
        %s1184 = sand.u32 %s185, 1
        %s1185 = smul.addr %s1184, 8
        %s1186 = scalar_lea.vmem [#allocation7], %s1185
        // Predicated region
        $region53: #{tpu_custom_call.1} parent=47 // pred_check
          %p1187 = pneg %p195
        $region54: #{tpu_custom_call.1} parent=47 // pred_check_branch
          %1189 = sbr.rel (%p1187) target = $region56
        $region55: #{tpu_custom_call.1} parent=47 // pred_region
          %s1191 = ssub.s32 128, 128
          %1192 = vsyncadd %s1183, %s1191
          %s1193 = smul.addr %s25, 2
          %s1194 = smul.addr %s1193, 64
          %s1195 = scalar_lea.hbm %s7, %s1194
          %s1197 = sshll.u32 %s1186, 4
          %s1198 = int_to_ptr.vmem [resolvable:$true] %s1197
          %1200 = dma.vmem_to_hbm [thread:$0]  %s1198, 128, %s1195, %s1183
        $region56: #{tpu_custom_call.1} parent=47 // pred_fallthru
          _
      $region48: #{tpu_custom_call.1} parent=5 // pred_fallthru
        _
      %p1201 = scmp.le.s32.totalorder 2, %s20
      // Predicated region
      $region57: #{tpu_custom_call.1} parent=5 // pred_check
        %p1202 = pneg %p1201
      $region58: #{tpu_custom_call.1} parent=5 // pred_check_branch
        %1204 = sbr.rel (%p1202) target = $region60
      $region59: #{tpu_custom_call.1} parent=5 // pred_region
        %s1205 = ssub.s32 %s20, 2
        // Predicated region
        $region61: #{tpu_custom_call.1} parent=59 // pred_check
          %p1206 = pneg %p201
        $region62: #{tpu_custom_call.1} parent=59 // pred_check_branch
          %1208 = sbr.rel (%p1206) target = $region64
        $region63: #{tpu_custom_call.1} parent=59 // pred_region
          %s1209 = sand.u32 %s186, 1
          %s1210 = scalar_lea.sflag [#allocation5], %s1209
          %s1211 = sand.u32 %s186, 1
          %s1212 = smul.addr %s1211, 8
          %s1213 = scalar_lea.vmem [#allocation7], %s1212
          %1214 = dma.done %s1210, 128
        $region64: #{tpu_custom_call.1} parent=59 // pred_fallthru
          _
      $region60: #{tpu_custom_call.1} parent=5 // pred_fallthru
        _
    $region6: #{tpu_custom_call.1} parent=1 // loop_footer
      %s24 = sadd.s32 1, %s20
    $region7: #{tpu_custom_call.1} parent=1 // loop_footer_branch
      %19 = sbr.rel target = $region3
    $region8: #{tpu_custom_call.1} parent=1 // loop_exit
      _
    %1215 = vsyncpa [#allocation5], 1
    %s1216 = scalar_lea.sflag [#allocation5], 1
    %1217 = vsyncpa %s1216, 1
    %1218 = vsyncpa [#allocation6], 1
    %s1219 = scalar_lea.sflag [#allocation6], 1
    %1220 = vsyncpa %s1219, 1

</llo_original>
